<compile_context>
chip_gen: v7x
topology: tpu7x:2x2x1
jax: 0.10.0
libtpu: 0.0.40
codegen_flags: <defaults>
</compile_context>

<pallas_src>
import numpy as np

import jax
import jax.numpy as jnp
from jax import lax
from jax.experimental import pallas as pl
from jax.experimental.pallas import tpu as pltpu


def _round_up(v, m):
    return (v + m - 1) // m * m


def _pad2(a, rows, cols):
    a = jnp.asarray(a, jnp.float32)
    return jnp.pad(a, ((0, rows - a.shape[0]), (0, cols - a.shape[1])))


def _phm_gine_kernel(off_ref, cnt_ref,                 # scalar-prefetch (SMEM)
                     dst_ref, msg_ref, x_ref,          # edge-tile / node-tile data
                     w1_ref, b1_ref, w2_ref, b2_ref,   # collapsed PHM weights
                     out_ref, acc_ref):
    i = pl.program_id(0)            # node tile   (parallel)
    j = pl.program_id(1)            # edge tile within node tile (reduction)
    cnt = cnt_ref[i]                # number of real edge tiles for this node tile

    TN = acc_ref.shape[0]
    TE = msg_ref.shape[0]

    @pl.when(j == 0)
    def _init():
        acc_ref[...] = jnp.zeros_like(acc_ref)

    @pl.when(j < cnt)
    def _scatter_add():
        # Tile-local one-hot scatter: rows of this node tile vs. dst of this
        # edge tile.  Sentinel dst == N_pad matches no row, so edge padding is
        # a harmless all-zero contribution.
        dst = dst_ref[...]                                        # (1, TE) int32
        rows = i * TN + lax.broadcasted_iota(jnp.int32, (TN, TE), 0)
        mask = (rows == dst).astype(jnp.float32)                  # (TN, TE)
        acc_ref[...] += jnp.dot(mask, msg_ref[...],
                                preferred_element_type=jnp.float32)

    @pl.when(j == cnt - 1)
    def _finalize():
        h = acc_ref[...] + x_ref[...]                             # add self-loops
        h1 = jnp.dot(h, w1_ref[...],
                     preferred_element_type=jnp.float32) + b1_ref[...]
        h1 = jnp.maximum(h1, 0.0)                                 # relu, norm=None
        out_ref[...] = (jnp.dot(h1, w2_ref[...],
                                preferred_element_type=jnp.float32) + b2_ref[...])


def phm_message_passing(x, edge_index, edge_attr, params):
    """x: (N, phm_dim*in_f) f32; edge_index: (2, E) int; edge_attr: (E, phm_dim*in_f) f32."""
    N, D_in = x.shape
    E = edge_attr.shape[0]
    W1, b1, W2, b2 = params
    D_hid = W1.shape[1]
    D_out = W2.shape[1]

    LANE = 128
    Dp_in, Dp_hid, Dp_out = (_round_up(d, LANE) for d in (D_in, D_hid, D_out))

    # Node tiles: 256 rows fills the 256-wide MXU M-dim on v6e/v7x (two passes
    # on v5e's 128-wide MXU -- still full).  Edge tiles sized from avg degree.
    TN = min(256, _round_up(N, 8))
    N_pad = _round_up(N, TN)
    node_tiles = N_pad // TN
    avg_e = max(1, E // node_tiles)
    TE = 512 if avg_e >= 512 else (256 if avg_e >= 256 else 128)

    # ---- host-side edge bucketing: sort by dst, pad each node tile's bucket
    # ---- to a multiple of TE edges, record per-tile offsets/counts (in tiles).
    src_np = np.asarray(edge_index[0], dtype=np.int64)
    dst_np = np.asarray(edge_index[1], dtype=np.int64)
    order = np.argsort(dst_np, kind="stable")
    dst_sorted = dst_np[order]
    group = dst_sorted // TN                                        # (E,)
    counts = np.bincount(group, minlength=node_tiles)[:node_tiles]
    tiles_per = np.maximum(1, -(-counts // TE)).astype(np.int32)    # >=1 tile each
    tile_off = np.zeros(node_tiles, np.int32)
    tile_off[1:] = np.cumsum(tiles_per)[:-1]
    G = int(tiles_per.sum())                                        # total edge tiles
    T_max = int(tiles_per.max())
    edge_start = np.zeros(node_tiles, np.int64)
    edge_start[1:] = np.cumsum(counts)[:-1]
    rank = np.arange(E, dtype=np.int64) - edge_start[group]
    slots = (tile_off[group].astype(np.int64) * TE + rank).astype(np.int32)

    # ---- device-side data prep: gather messages in the wrapper (XLA gather),
    # ---- scatter them into the dst-sorted, per-tile-padded edge layout.
    x32 = jnp.asarray(x, jnp.float32)
    msg = x32[jnp.asarray(src_np)] + jnp.asarray(edge_attr, jnp.float32)   # (E, D_in)
    msg = jnp.pad(msg, ((0, 0), (0, Dp_in - D_in)))
    msg_pad = jnp.zeros((G * TE, Dp_in), jnp.float32)
    msg_pad = msg_pad.at[jnp.asarray(slots)].set(msg[jnp.asarray(order)])

    dst_pad = jnp.full((G * TE,), N_pad, jnp.int32)                 # sentinel: no match
    dst_pad = dst_pad.at[jnp.asarray(slots)].set(jnp.asarray(dst_sorted, jnp.int32))
    dst_pad = dst_pad.reshape(1, G * TE)                            # lane-major

    x_p = _pad2(x32, N_pad, Dp_in)
    w1_p = _pad2(W1, Dp_in, Dp_hid)
    b1_p = _pad2(b1, 1, Dp_hid)
    w2_p = _pad2(W2, Dp_hid, Dp_out)
    b2_p = _pad2(b2, 1, Dp_out)

    tile_off_j = jnp.asarray(tile_off, jnp.int32)
    tiles_per_j = jnp.asarray(tiles_per, jnp.int32)

    grid = (node_tiles, T_max)

    # Clamp the edge-tile index for steps beyond this node tile's count: same
    # block index as the previous step -> no re-DMA, and compute is skipped.
    def _edge_tile(i, j, off, cnt):
        return off[i] + jnp.minimum(j, cnt[i] - 1)

    cost = pl.CostEstimate(
        flops=int(2 * G * TE * TN * Dp_in
                  + 2 * N_pad * (Dp_in * Dp_hid + Dp_hid * Dp_out)),
        transcendentals=0,
        bytes_accessed=int(4 * (G * TE * Dp_in + G * TE + N_pad * Dp_in
                                + Dp_in * Dp_hid + Dp_hid * Dp_out
                                + Dp_hid + Dp_out + N_pad * Dp_out)),
    )

    out_p = pl.pallas_call(
        _phm_gine_kernel,
        out_shape=jax.ShapeDtypeStruct((N_pad, Dp_out), jnp.float32),
        grid_spec=pltpu.PrefetchScalarGridSpec(
            num_scalar_prefetch=2,
            grid=grid,
            in_specs=[
                pl.BlockSpec((1, TE),
                             lambda i, j, off, cnt: (0, _edge_tile(i, j, off, cnt))),
                pl.BlockSpec((TE, Dp_in),
                             lambda i, j, off, cnt: (_edge_tile(i, j, off, cnt), 0)),
                pl.BlockSpec((TN, Dp_in), lambda i, j, off, cnt: (i, 0)),    # x tile
                pl.BlockSpec((Dp_in, Dp_hid), lambda i, j, off, cnt: (0, 0)),  # W1
                pl.BlockSpec((1, Dp_hid), lambda i, j, off, cnt: (0, 0)),      # b1
                pl.BlockSpec((Dp_hid, Dp_out), lambda i, j, off, cnt: (0, 0)), # W2
                pl.BlockSpec((1, Dp_out), lambda i, j, off, cnt: (0, 0)),      # b2
            ],
            out_specs=pl.BlockSpec((TN, Dp_out), lambda i, j, off, cnt: (i, 0)),
            scratch_shapes=[pltpu.VMEM((TN, Dp_in), jnp.float32)],   # aggregate acc
        ),
        compiler_params=pltpu.CompilerParams(
            dimension_semantics=("parallel", "arbitrary"),
        ),
        cost_estimate=cost,
    )(tile_off_j, tiles_per_j, dst_pad, msg_pad, x_p, w1_p, b1_p, w2_p, b2_p)

    return out_p[:N, :D_out]


def make_phm_linear_params(key, in_f, out_f, phm_dim):
    """Deterministic synthetic PHMLinear params.

    Returns the collapsed hypercomplex weight H = sum_k kron(A_k, W_k) of shape
    (phm_dim*in_f, phm_dim*out_f) and bias (1, phm_dim*out_f).
    """
    k_a, k_w, k_b = jax.random.split(key, 3)
    A = jax.random.normal(k_a, (phm_dim, phm_dim, phm_dim), jnp.float32) / phm_dim
    W = jax.random.normal(k_w, (phm_dim, in_f, out_f), jnp.float32) / jnp.sqrt(
        jnp.float32(phm_dim * in_f))
    H = jnp.einsum('kij,kab->iajb', A, W).reshape(phm_dim * in_f, phm_dim * out_f)
    b = 0.01 * jax.random.normal(k_b, (1, phm_dim * out_f), jnp.float32)
    return H, b


if __name__ == "__main__":
    key = jax.random.PRNGKey(0)
    phm_dim, in_features, out_features = 4, 8, 8
    N, E = 500, 2048                              # 2 node tiles (TN=256), TE=512
    D_in = phm_dim * in_features                  # 32

    kx, ke, ks, kd, kp1, kp2 = jax.random.split(key, 6)
    x = jax.random.normal(kx, (N, D_in), jnp.float32)
    edge_src = jax.random.randint(ks, (E,), 0, N)
    edge_dst = jax.random.randint(kd, (E,), 0, N)
    edge_index = jnp.stack([edge_src, edge_dst]).astype(jnp.int32)   # (2, E)
    edge_attr = jax.random.normal(ke, (E, D_in), jnp.float32)

    # PHMMLP with factor=1: in_features -> out_features -> out_features
    W1, b1 = make_phm_linear_params(kp1, in_features, out_features, phm_dim)
    W2, b2 = make_phm_linear_params(kp2, out_features, out_features, phm_dim)

    out = phm_message_passing(x, edge_index, edge_attr, (W1, b1, W2, b2))
    out = jax.block_until_ready(out)

    # pure-JAX reference for the same forward pass
    msg = x[edge_index[0]] + edge_attr
    agg = jnp.zeros((N, D_in), jnp.float32).at[edge_index[1]].add(msg)
    h = agg + x
    h1 = jnp.maximum(
        jnp.dot(h, W1, precision=jax.lax.Precision.HIGHEST) + b1, 0.0)
    ref = jnp.dot(h1, W2, precision=jax.lax.Precision.HIGHEST) + b2

    assert out.shape == (N, phm_dim * out_features)
    max_diff = float(jnp.max(jnp.abs(out - ref)))
    assert jnp.allclose(out, ref, atol=2e-4, rtol=2e-4), f"max abs diff {max_diff}"
    print("KERNEL_OK")
</pallas_src>

<mosaic_0001>
module attributes {stable_mosaic.version = 11 : i64} {
  func.func @_phm_gine_kernel(%arg0: i32, %arg1: i32, %arg2: memref<2xi32, #tpu.memory_space<smem>>, %arg3: memref<2xi32, #tpu.memory_space<smem>>, %arg4: memref<1x512xi32, #tpu.memory_space<vmem>>, %arg5: memref<512x128xf32, #tpu.memory_space<vmem>>, %arg6: memref<256x128xf32, #tpu.memory_space<vmem>>, %arg7: memref<128x128xf32, #tpu.memory_space<vmem>>, %arg8: memref<1x128xf32, #tpu.memory_space<vmem>>, %arg9: memref<128x128xf32, #tpu.memory_space<vmem>>, %arg10: memref<1x128xf32, #tpu.memory_space<vmem>>, %arg11: memref<256x128xf32, #tpu.memory_space<vmem>>, %arg12: memref<256x128xf32, #tpu.memory_space<vmem>>) attributes {dimension_semantics = [#tpu.dimension_semantics<parallel>, #tpu.dimension_semantics<arbitrary>], iteration_bounds = array<i64: 2, 3>, scalar_prefetch = 2 : i64, scratch_operands = 1 : i64, tpu.core_type = #tpu.core_type<tc>, window_params = [{transform_indices = @transform_0, window_bounds = array<i64: 1, 512>}, {transform_indices = @transform_1, window_bounds = array<i64: 512, 128>}, {transform_indices = @transform_2, window_bounds = array<i64: 256, 128>}, {pipeline_mode = #tpu.pipeline_mode<synchronous>, transform_indices = @transform_3, window_bounds = array<i64: 128, 128>}, {pipeline_mode = #tpu.pipeline_mode<synchronous>, transform_indices = @transform_4, window_bounds = array<i64: 1, 128>}, {pipeline_mode = #tpu.pipeline_mode<synchronous>, transform_indices = @transform_5, window_bounds = array<i64: 128, 128>}, {pipeline_mode = #tpu.pipeline_mode<synchronous>, transform_indices = @transform_6, window_bounds = array<i64: 1, 128>}, {transform_indices = @transform_7, window_bounds = array<i64: 256, 128>}]} {
    %0 = arith.index_cast %arg0 : i32 to index
    %1 = memref.load %arg3[%0] : memref<2xi32, #tpu.memory_space<smem>>
    %c0_i32 = arith.constant 0 : i32
    %2 = arith.cmpi eq, %arg1, %c0_i32 : i32
    %3 = arith.extui %2 : i1 to i32
    %c0_i32_0 = arith.constant 0 : i32
    %4 = arith.cmpi ne, %3, %c0_i32_0 : i32
    scf.if %4 {
      %cst = arith.constant 0.000000e+00 : f32
      %12 = vector.broadcast %cst : f32 to vector<256x128xf32>
      %c0 = arith.constant 0 : index
      %c0_3 = arith.constant 0 : index
      %13 = vector.load %arg12[%c0, %c0_3] : memref<256x128xf32, #tpu.memory_space<vmem>>, vector<256x128xf32>
      tpu.vector_store %arg12[%c0, %c0_3], %12 {strides = array<i32>} : memref<256x128xf32, #tpu.memory_space<vmem>>, vector<256x128xf32>,
    } else {
    }
    %5 = arith.cmpi slt, %arg1, %1 : i32
    %6 = arith.extui %5 : i1 to i32
    %c0_i32_1 = arith.constant 0 : i32
    %7 = arith.cmpi ne, %6, %c0_i32_1 : i32
    scf.if %7 {
      %c0 = arith.constant 0 : index
      %c0_3 = arith.constant 0 : index
      %12 = vector.load %arg4[%c0, %c0_3] : memref<1x512xi32, #tpu.memory_space<vmem>>, vector<1x512xi32>
      %c256_i32 = arith.constant 256 : i32
      %13 = arith.muli %arg0, %c256_i32 : i32
      %14 = tpu.iota {dimensions = array<i32: 0>} : vector<256x512xi32>
      %15 = vector.broadcast %13 : i32 to vector<256x512xi32>
      %16 = arith.addi %15, %14 : vector<256x512xi32>
      %17 = vector.broadcast %12 : vector<1x512xi32> to vector<256x512xi32>
      %18 = arith.cmpi eq, %16, %17 : vector<256x512xi32>
      %19 = arith.extui %18 : vector<256x512xi1> to vector<256x512xi32>
      %20 = arith.sitofp %19 : vector<256x512xi32> to vector<256x512xf32>
      %c0_4 = arith.constant 0 : index
      %c0_5 = arith.constant 0 : index
      %21 = vector.load %arg12[%c0_4, %c0_5] : memref<256x128xf32, #tpu.memory_space<vmem>>, vector<256x128xf32>
      %c0_6 = arith.constant 0 : index
      %c0_7 = arith.constant 0 : index
      %22 = vector.load %arg5[%c0_6, %c0_7] : memref<512x128xf32, #tpu.memory_space<vmem>>, vector<512x128xf32>
      %cst = arith.constant dense<0.000000e+00> : vector<256x128xf32>
      %23 = tpu.matmul %20, %22, %cst {dimension_numbers = #tpu.dot_dimension_numbers<[1], [0], [0], [1], [0, 0, 1, 1], [], []>} : vector<256x512xf32>, vector<512x128xf32>, vector<256x128xf32> -> vector<256x128xf32>
      %24 = arith.addf %21, %23 : vector<256x128xf32>
      %c0_8 = arith.constant 0 : index
      %c0_9 = arith.constant 0 : index
      %25 = vector.load %arg12[%c0_8, %c0_9] : memref<256x128xf32, #tpu.memory_space<vmem>>, vector<256x128xf32>
      tpu.vector_store %arg12[%c0_8, %c0_9], %24 {strides = array<i32>} : memref<256x128xf32, #tpu.memory_space<vmem>>, vector<256x128xf32>,
    } else {
    }
    %c1_i32 = arith.constant 1 : i32
    %8 = arith.subi %1, %c1_i32 : i32
    %9 = arith.cmpi eq, %arg1, %8 : i32
    %10 = arith.extui %9 : i1 to i32
    %c0_i32_2 = arith.constant 0 : i32
    %11 = arith.cmpi ne, %10, %c0_i32_2 : i32
    scf.if %11 {
      %c0 = arith.constant 0 : index
      %c0_3 = arith.constant 0 : index
      %12 = vector.load %arg12[%c0, %c0_3] : memref<256x128xf32, #tpu.memory_space<vmem>>, vector<256x128xf32>
      %c0_4 = arith.constant 0 : index
      %c0_5 = arith.constant 0 : index
      %13 = vector.load %arg6[%c0_4, %c0_5] : memref<256x128xf32, #tpu.memory_space<vmem>>, vector<256x128xf32>
      %14 = arith.addf %12, %13 : vector<256x128xf32>
      %c0_6 = arith.constant 0 : index
      %c0_7 = arith.constant 0 : index
      %15 = vector.load %arg7[%c0_6, %c0_7] : memref<128x128xf32, #tpu.memory_space<vmem>>, vector<128x128xf32>
      %cst = arith.constant dense<0.000000e+00> : vector<256x128xf32>
      %16 = tpu.matmul %14, %15, %cst {dimension_numbers = #tpu.dot_dimension_numbers<[1], [0], [0], [1], [0, 0, 1, 1], [], []>} : vector<256x128xf32>, vector<128x128xf32>, vector<256x128xf32> -> vector<256x128xf32>
      %c0_8 = arith.constant 0 : index
      %c0_9 = arith.constant 0 : index
      %17 = vector.load %arg8[%c0_8, %c0_9] : memref<1x128xf32, #tpu.memory_space<vmem>>, vector<1x128xf32>
      %18 = vector.broadcast %17 : vector<1x128xf32> to vector<256x128xf32>
      %19 = arith.addf %16, %18 : vector<256x128xf32>
      %cst_10 = arith.constant 0.000000e+00 : f32
      %20 = vector.broadcast %cst_10 : f32 to vector<256x128xf32>
      %21 = arith.maximumf %19, %20 : vector<256x128xf32>
      %c0_11 = arith.constant 0 : index
      %c0_12 = arith.constant 0 : index
      %22 = vector.load %arg9[%c0_11, %c0_12] : memref<128x128xf32, #tpu.memory_space<vmem>>, vector<128x128xf32>
      %cst_13 = arith.constant dense<0.000000e+00> : vector<256x128xf32>
      %23 = tpu.matmul %21, %22, %cst_13 {dimension_numbers = #tpu.dot_dimension_numbers<[1], [0], [0], [1], [0, 0, 1, 1], [], []>} : vector<256x128xf32>, vector<128x128xf32>, vector<256x128xf32> -> vector<256x128xf32>
      %c0_14 = arith.constant 0 : index
      %c0_15 = arith.constant 0 : index
      %24 = vector.load %arg10[%c0_14, %c0_15] : memref<1x128xf32, #tpu.memory_space<vmem>>, vector<1x128xf32>
      %25 = vector.broadcast %24 : vector<1x128xf32> to vector<256x128xf32>
      %26 = arith.addf %23, %25 : vector<256x128xf32>
      %c0_16 = arith.constant 0 : index
      %c0_17 = arith.constant 0 : index
      %27 = vector.load %arg11[%c0_16, %c0_17] : memref<256x128xf32, #tpu.memory_space<vmem>>, vector<256x128xf32>
      tpu.vector_store %arg11[%c0_16, %c0_17], %26 {strides = array<i32>} : memref<256x128xf32, #tpu.memory_space<vmem>>, vector<256x128xf32>,
    } else {
    }
    return
  }
  func.func @transform_0(%arg0: i32, %arg1: i32, %arg2: memref<2xi32, #tpu.memory_space<smem>>, %arg3: memref<2xi32, #tpu.memory_space<smem>>) -> (i32, i32) {
    %0 = arith.index_cast %arg0 : i32 to index
    %1 = memref.load %arg2[%0] : memref<2xi32, #tpu.memory_space<smem>>
    %2 = arith.index_cast %arg0 : i32 to index
    %3 = memref.load %arg3[%2] : memref<2xi32, #tpu.memory_space<smem>>
    %c1_i32 = arith.constant 1 : i32
    %4 = arith.subi %3, %c1_i32 : i32
    %5 = arith.minsi %arg1, %4 : i32
    %6 = arith.addi %1, %5 : i32
    %c0_i32 = arith.constant 0 : i32
    %c0_i32_0 = arith.constant 0 : i32
    return %c0_i32, %6 : i32, i32
  }
  func.func @transform_1(%arg0: i32, %arg1: i32, %arg2: memref<2xi32, #tpu.memory_space<smem>>, %arg3: memref<2xi32, #tpu.memory_space<smem>>) -> (i32, i32) {
    %0 = arith.index_cast %arg0 : i32 to index
    %1 = memref.load %arg2[%0] : memref<2xi32, #tpu.memory_space<smem>>
    %2 = arith.index_cast %arg0 : i32 to index
    %3 = memref.load %arg3[%2] : memref<2xi32, #tpu.memory_space<smem>>
    %c1_i32 = arith.constant 1 : i32
    %4 = arith.subi %3, %c1_i32 : i32
    %5 = arith.minsi %arg1, %4 : i32
    %6 = arith.addi %1, %5 : i32
    %c0_i32 = arith.constant 0 : i32
    %c0_i32_0 = arith.constant 0 : i32
    return %6, %c0_i32 : i32, i32
  }
  func.func @transform_2(%arg0: i32, %arg1: i32, %arg2: memref<2xi32, #tpu.memory_space<smem>>, %arg3: memref<2xi32, #tpu.memory_space<smem>>) -> (i32, i32) {
    %c0_i32 = arith.constant 0 : i32
    %c0_i32_0 = arith.constant 0 : i32
    return %arg0, %c0_i32 : i32, i32
  }
  func.func @transform_3(%arg0: i32, %arg1: i32, %arg2: memref<2xi32, #tpu.memory_space<smem>>, %arg3: memref<2xi32, #tpu.memory_space<smem>>) -> (i32, i32) {
    %c0_i32 = arith.constant 0 : i32
    %c0_i32_0 = arith.constant 0 : i32
    %c0_i32_1 = arith.constant 0 : i32
    return %c0_i32, %c0_i32_0 : i32, i32
  }
  func.func @transform_4(%arg0: i32, %arg1: i32, %arg2: memref<2xi32, #tpu.memory_space<smem>>, %arg3: memref<2xi32, #tpu.memory_space<smem>>) -> (i32, i32) {
    %c0_i32 = arith.constant 0 : i32
    %c0_i32_0 = arith.constant 0 : i32
    %c0_i32_1 = arith.constant 0 : i32
    return %c0_i32, %c0_i32_0 : i32, i32
  }
  func.func @transform_5(%arg0: i32, %arg1: i32, %arg2: memref<2xi32, #tpu.memory_space<smem>>, %arg3: memref<2xi32, #tpu.memory_space<smem>>) -> (i32, i32) {
    %c0_i32 = arith.constant 0 : i32
    %c0_i32_0 = arith.constant 0 : i32
    %c0_i32_1 = arith.constant 0 : i32
    return %c0_i32, %c0_i32_0 : i32, i32
  }
  func.func @transform_6(%arg0: i32, %arg1: i32, %arg2: memref<2xi32, #tpu.memory_space<smem>>, %arg3: memref<2xi32, #tpu.memory_space<smem>>) -> (i32, i32) {
    %c0_i32 = arith.constant 0 : i32
    %c0_i32_0 = arith.constant 0 : i32
    %c0_i32_1 = arith.constant 0 : i32
    return %c0_i32, %c0_i32_0 : i32, i32
  }
  func.func @transform_7(%arg0: i32, %arg1: i32, %arg2: memref<2xi32, #tpu.memory_space<smem>>, %arg3: memref<2xi32, #tpu.memory_space<smem>>) -> (i32, i32) {
    %c0_i32 = arith.constant 0 : i32
    %c0_i32_0 = arith.constant 0 : i32
    return %arg0, %c0_i32 : i32, i32
  }
}

</mosaic_0001>

<llo_original>
// kernel: tpu_custom_call.1
$region0: #{tpu_custom_call.1}
  #allocation0 [shape = 'u32[]', space=smem, size = 0x4, offset = 0x4, fixed_abs, tag = 'smem constant byte address 0x4 - core index']
  #allocation1 [shape = 'u32[144,128]{1,0:T(1,128)}', space=vmem, size = 0x12000, scoped, tag = 'internal scratch']
  #allocation2 [shape = 'f32[256,128]{1,0:T(8,128)}', space=vmem, size = 0x20000, scoped, tag = 'scratch operand']
  #allocation3 [shape = 's32[1]{0}', space=sflag, size = 0x4, scoped, tag = 'scoped memory for tpu_custom_call.1']
  #allocation4 [shape = 'u8[512]{0}', space=smem, size = 0x200, scoped, tag = 'prefetched SMEM operand 0']
  #allocation5 [shape = 'u8[512]{0}', space=smem, size = 0x200, scoped, tag = 'prefetched SMEM operand 1']
  %s0 = inlined_call_operand.hbm [shape: s32[2], index: 0, kind: input, shape index: {}]
  %s1 = inlined_call_operand.hbm [shape: s32[2], index: 1, kind: input, shape index: {}]
  %s2 = inlined_call_operand.hbm [shape: s32[1,2560], index: 2, kind: input, shape index: {}]
  %s3 = inlined_call_operand.hbm [shape: f32[2560,128], index: 3, kind: input, shape index: {}]
  %s4 = inlined_call_operand.hbm [shape: f32[512,128], index: 4, kind: input, shape index: {}]
  %s5 = inlined_call_operand.hbm [shape: f32[128,128], index: 5, kind: input, shape index: {}]
  %s6 = inlined_call_operand.hbm [shape: f32[1,128], index: 6, kind: input, shape index: {}]
  %s7 = inlined_call_operand.hbm [shape: f32[128,128], index: 7, kind: input, shape index: {}]
  %s8 = inlined_call_operand.hbm [shape: f32[1,128], index: 8, kind: input, shape index: {}]
  %s9 = inlined_call_operand.hbm [shape: f32[512,128], index: 9, kind: output, shape index: {}]
  %s10 = sld [smem:[#allocation0]]
  $region101: #{tpu_custom_call.1} parent=0
    _
  %s12 = ssub.s32 1, %s10
  %s13 = scalar_select 0, %s12, %s10
  %15 = dma.hbm_to_smem %s0, 16, [#allocation4], [#allocation3]
  %17 = dma.hbm_to_smem %s1, 16, [#allocation5], [#allocation3]
  %18 = dma.done [#allocation3], 32
  %19 = sfence
  $region1: #{tpu_custom_call.1} parent=0
    #allocation6 [shape = 'u8[4096]{0}', space=vmem, size = 0x1000, scoped, tag = 'input window, operand 2']
    #allocation7 [shape = 's32[2]{0}', space=sflag, size = 0x8, scoped, tag = 'scoped memory for tpu_custom_call.1']
    #allocation8 [shape = 's32[2]{0}', space=sflag, size = 0x8, scoped, tag = 'scoped memory for tpu_custom_call.1']
    #allocation9 [shape = 'u8[524288]{0}', space=vmem, size = 0x80000, scoped, tag = 'input window, operand 3']
    #allocation10 [shape = 's32[2]{0}', space=sflag, size = 0x8, scoped, tag = 'scoped memory for tpu_custom_call.1']
    #allocation11 [shape = 'u8[262144]{0}', space=vmem, size = 0x40000, scoped, tag = 'input window, operand 4']
    #allocation12 [shape = 'u8[65536]{0}', space=vmem, size = 0x10000, scoped, tag = 'input window, operand 5, single buffered']
    #allocation13 [shape = 's32[1]{0}', space=sflag, size = 0x4, scoped, tag = 'scoped memory for tpu_custom_call.1']
    #allocation14 [shape = 'u8[512]{0}', space=vmem, size = 0x400, scoped, tag = 'input window, operand 6, single buffered']
    #allocation15 [shape = 'u8[65536]{0}', space=vmem, size = 0x10000, scoped, tag = 'input window, operand 7, single buffered']
    #allocation16 [shape = 's32[1]{0}', space=sflag, size = 0x4, scoped, tag = 'scoped memory for tpu_custom_call.1']
    #allocation17 [shape = 'u8[512]{0}', space=vmem, size = 0x400, scoped, tag = 'input window, operand 8, single buffered']
    #allocation18 [shape = 'u8[262144]{0}', space=vmem, size = 0x40000, scoped, tag = 'output window, operand 0']
    %20 = vsyncpa [#allocation7], 0
    %s21 = scalar_lea.sflag [#allocation7], 1
    %22 = vsyncpa %s21, 0
    %23 = vsyncpa [#allocation10], 0
    %s24 = scalar_lea.sflag [#allocation10], 1
    %25 = vsyncpa %s24, 0
    %26 = vsyncpa [#allocation13], 0
    %27 = vsyncpa [#allocation16], 0
    %28 = vsyncpa [#allocation8], 0
    %s29 = scalar_lea.sflag [#allocation8], 1
    %30 = vsyncpa %s29, 0
    loop: start=0, step=1, limit=8
    $region2: #{tpu_custom_call.1} parent=1 // loop_pre_header
      _
    $region3: #{tpu_custom_call.1} parent=1 // loop_header
      %s32 = sphi 0, %s36
      %p33 = scmp.ge.s32.totalorder %s32, 8
      %s39 = sphi 0, %s51
      %s40 = sphi 0, %s47
      %s41 = sphi 0, %s39
      %s42 = sphi 0, %s40
      %s43 = sphi 0, %s41
      %s44 = sphi 0, %s42
      %s66 = sphi 0, %s68
      %s69 = sphi 0, %s66
      %s70 = sphi 0, %s69
      %s86 = sphi 0, %s70
      %s104 = sphi 0, %s106
      %s107 = sphi 0, %s104
      %s108 = sphi 0, %s107
      %s124 = sphi 0, %s108
      %s130 = sphi 0, %s132
      %s133 = sphi 0, %s130
      %s134 = sphi 0, %s133
      %s150 = sphi 0, %s134
      %s154 = sphi 0, %s154
      %s156 = sphi 0, %s154
      %s157 = sphi 0, %s156
      %s171 = sphi 0, %s157
      %s175 = sphi 0, %s175
      %s177 = sphi 0, %s175
      %s178 = sphi 0, %s177
      %s192 = sphi 0, %s178
      %s196 = sphi 0, %s196
      %s198 = sphi 0, %s196
      %s199 = sphi 0, %s198
      %s213 = sphi 0, %s199
      %s217 = sphi 0, %s217
      %s219 = sphi 0, %s217
      %s220 = sphi 0, %s219
      %s234 = sphi 0, %s220
      %s240 = sphi 0, %s242
      %s243 = sphi 0, %s240
      %s244 = sphi 0, %s243
      %s260 = sphi 0, %s244
    $region4: #{tpu_custom_call.1} parent=1 // loop_header_branch
      %35 = sbr.rel (%p33) target = $region8
    $region5: #{tpu_custom_call.1} parent=1 // loop_body
      %s37 = ssub.s32 %s32, 1
      %s38 = ssub.s32 %s32, 2
      %s45 = sadd.s32 1, %s40
      %p46 = scmp.ge.s32.totalorder %s45, 3
      %s47 = scalar_select %p46, 0, %s45
      %s48 = sadd.s32 1, %s39
      %s49 = scalar_select %p46, %s48, %s39
      %p50 = scmp.ge.s32.totalorder %s49, 2
      %s51 = scalar_select %p50, 0, %s49
      %s52 = sld [smem:[#allocation4 + %s39]]
      %s53 = sld [smem:[#allocation5 + %s39]]
      %s54 = ssub.s32 %s53, 1
      %p55 = scmp.lt.s32.totalorder %s40, %s54
      %s56 = scalar_select %p55, %s40, %s54
      %s57 = sadd.s32 %s52, %s56
      %s58 = sld [smem:[#allocation4 + %s51]]
      %s59 = sld [smem:[#allocation5 + %s51]]
      %s60 = ssub.s32 %s59, 1
      %p61 = scmp.lt.s32.totalorder %s47, %s60
      %s62 = scalar_select %p61, %s47, %s60
      %s63 = sadd.s32 %s58, %s62
      %s64 = ssub.s32 %s57, %s63
      %p65 = scmp.eq.s32.totalorder %s64, 0
      %s67 = sadd.s32 %s66, 1
      %s68 = scalar_select %p65, %s66, %s67
      %p71 = pneg %p65
      %p72 = scmp.eq.s32.totalorder %s32, 5
      %p73 = por %p71, %p72
      %p74 = scmp.ne.s32.totalorder %s66, %s69
      %p75 = scmp.eq.s32.totalorder %s32, 0
      %p76 = por %p74, %p75
      %p77 = scmp.ne.s32.totalorder %s66, %s69
      %p78 = scmp.eq.s32.totalorder %s37, 5
      %p79 = por %p77, %p78
      %p80 = scmp.ne.s32.totalorder %s69, %s70
      %p81 = scmp.eq.s32.totalorder %s37, 0
      %p82 = por %p80, %p81
      %p83 = scmp.ne.s32.totalorder %s69, %s70
      %p84 = scmp.eq.s32.totalorder %s38, 5
      %p85 = por %p83, %p84
      %p87 = scmp.ne.s32.totalorder %s70, %s86
      %p88 = scmp.eq.s32.totalorder %s38, 0
      %p89 = por %p87, %p88
      %s90 = sld [smem:[#allocation4 + %s39]]
      %s91 = sld [smem:[#allocation5 + %s39]]
      %s92 = ssub.s32 %s91, 1
      %p93 = scmp.lt.s32.totalorder %s40, %s92
      %s94 = scalar_select %p93, %s40, %s92
      %s95 = sadd.s32 %s90, %s94
      %s96 = sld [smem:[#allocation4 + %s51]]
      %s97 = sld [smem:[#allocation5 + %s51]]
      %s98 = ssub.s32 %s97, 1
      %p99 = scmp.lt.s32.totalorder %s47, %s98
      %s100 = scalar_select %p99, %s47, %s98
      %s101 = sadd.s32 %s96, %s100
      %s102 = ssub.s32 %s95, %s101
      %p103 = scmp.eq.s32.totalorder %s102, 0
      %s105 = sadd.s32 %s104, 1
      %s106 = scalar_select %p103, %s104, %s105
      %p109 = pneg %p103
      %p110 = scmp.eq.s32.totalorder %s32, 5
      %p111 = por %p109, %p110
      %p112 = scmp.ne.s32.totalorder %s104, %s107
      %p113 = scmp.eq.s32.totalorder %s32, 0
      %p114 = por %p112, %p113
      %p115 = scmp.ne.s32.totalorder %s104, %s107
      %p116 = scmp.eq.s32.totalorder %s37, 5
      %p117 = por %p115, %p116
      %p118 = scmp.ne.s32.totalorder %s107, %s108
      %p119 = scmp.eq.s32.totalorder %s37, 0
      %p120 = por %p118, %p119
      %p121 = scmp.ne.s32.totalorder %s107, %s108
      %p122 = scmp.eq.s32.totalorder %s38, 5
      %p123 = por %p121, %p122
      %p125 = scmp.ne.s32.totalorder %s108, %s124
      %p126 = scmp.eq.s32.totalorder %s38, 0
      %p127 = por %p125, %p126
      %s128 = ssub.s32 %s39, %s51
      %p129 = scmp.eq.s32.totalorder %s128, 0
      %s131 = sadd.s32 %s130, 1
      %s132 = scalar_select %p129, %s130, %s131
      %p135 = pneg %p129
      %p136 = scmp.eq.s32.totalorder %s32, 5
      %p137 = por %p135, %p136
      %p138 = scmp.ne.s32.totalorder %s130, %s133
      %p139 = scmp.eq.s32.totalorder %s32, 0
      %p140 = por %p138, %p139
      %p141 = scmp.ne.s32.totalorder %s130, %s133
      %p142 = scmp.eq.s32.totalorder %s37, 5
      %p143 = por %p141, %p142
      %p144 = scmp.ne.s32.totalorder %s133, %s134
      %p145 = scmp.eq.s32.totalorder %s37, 0
      %p146 = por %p144, %p145
      %p147 = scmp.ne.s32.totalorder %s133, %s134
      %p148 = scmp.eq.s32.totalorder %s38, 5
      %p149 = por %p147, %p148
      %p151 = scmp.ne.s32.totalorder %s134, %s150
      %p152 = scmp.eq.s32.totalorder %s38, 0
      %p153 = por %p151, %p152
      %s155 = sadd.s32 %s154, 1
      %p158 = scmp.eq.s32.totalorder %s32, 5
      %p159 = scmp.ne.s32.totalorder %s154, %s156
      %p160 = scmp.eq.s32.totalorder %s32, 0
      %p161 = por %p159, %p160
      %p162 = scmp.ne.s32.totalorder %s154, %s156
      %p163 = scmp.eq.s32.totalorder %s37, 5
      %p164 = por %p162, %p163
      %p165 = scmp.ne.s32.totalorder %s156, %s157
      %p166 = scmp.eq.s32.totalorder %s37, 0
      %p167 = por %p165, %p166
      %p168 = scmp.ne.s32.totalorder %s156, %s157
      %p169 = scmp.eq.s32.totalorder %s38, 5
      %p170 = por %p168, %p169
      %p172 = scmp.ne.s32.totalorder %s157, %s171
      %p173 = scmp.eq.s32.totalorder %s38, 0
      %p174 = por %p172, %p173
      %s176 = sadd.s32 %s175, 1
      %p179 = scmp.eq.s32.totalorder %s32, 5
      %p180 = scmp.ne.s32.totalorder %s175, %s177
      %p181 = scmp.eq.s32.totalorder %s32, 0
      %p182 = por %p180, %p181
      %p183 = scmp.ne.s32.totalorder %s175, %s177
      %p184 = scmp.eq.s32.totalorder %s37, 5
      %p185 = por %p183, %p184
      %p186 = scmp.ne.s32.totalorder %s177, %s178
      %p187 = scmp.eq.s32.totalorder %s37, 0
      %p188 = por %p186, %p187
      %p189 = scmp.ne.s32.totalorder %s177, %s178
      %p190 = scmp.eq.s32.totalorder %s38, 5
      %p191 = por %p189, %p190
      %p193 = scmp.ne.s32.totalorder %s178, %s192
      %p194 = scmp.eq.s32.totalorder %s38, 0
      %p195 = por %p193, %p194
      %s197 = sadd.s32 %s196, 1
      %p200 = scmp.eq.s32.totalorder %s32, 5
      %p201 = scmp.ne.s32.totalorder %s196, %s198
      %p202 = scmp.eq.s32.totalorder %s32, 0
      %p203 = por %p201, %p202
      %p204 = scmp.ne.s32.totalorder %s196, %s198
      %p205 = scmp.eq.s32.totalorder %s37, 5
      %p206 = por %p204, %p205
      %p207 = scmp.ne.s32.totalorder %s198, %s199
      %p208 = scmp.eq.s32.totalorder %s37, 0
      %p209 = por %p207, %p208
      %p210 = scmp.ne.s32.totalorder %s198, %s199
      %p211 = scmp.eq.s32.totalorder %s38, 5
      %p212 = por %p210, %p211
      %p214 = scmp.ne.s32.totalorder %s199, %s213
      %p215 = scmp.eq.s32.totalorder %s38, 0
      %p216 = por %p214, %p215
      %s218 = sadd.s32 %s217, 1
      %p221 = scmp.eq.s32.totalorder %s32, 5
      %p222 = scmp.ne.s32.totalorder %s217, %s219
      %p223 = scmp.eq.s32.totalorder %s32, 0
      %p224 = por %p222, %p223
      %p225 = scmp.ne.s32.totalorder %s217, %s219
      %p226 = scmp.eq.s32.totalorder %s37, 5
      %p227 = por %p225, %p226
      %p228 = scmp.ne.s32.totalorder %s219, %s220
      %p229 = scmp.eq.s32.totalorder %s37, 0
      %p230 = por %p228, %p229
      %p231 = scmp.ne.s32.totalorder %s219, %s220
      %p232 = scmp.eq.s32.totalorder %s38, 5
      %p233 = por %p231, %p232
      %p235 = scmp.ne.s32.totalorder %s220, %s234
      %p236 = scmp.eq.s32.totalorder %s38, 0
      %p237 = por %p235, %p236
      %s238 = ssub.s32 %s39, %s51
      %p239 = scmp.eq.s32.totalorder %s238, 0
      %s241 = sadd.s32 %s240, 1
      %s242 = scalar_select %p239, %s240, %s241
      %p245 = pneg %p239
      %p246 = scmp.eq.s32.totalorder %s32, 5
      %p247 = por %p245, %p246
      %p248 = scmp.ne.s32.totalorder %s240, %s243
      %p249 = scmp.eq.s32.totalorder %s32, 0
      %p250 = por %p248, %p249
      %p251 = scmp.ne.s32.totalorder %s240, %s243
      %p252 = scmp.eq.s32.totalorder %s37, 5
      %p253 = por %p251, %p252
      %p254 = scmp.ne.s32.totalorder %s243, %s244
      %p255 = scmp.eq.s32.totalorder %s37, 0
      %p256 = por %p254, %p255
      %p257 = scmp.ne.s32.totalorder %s243, %s244
      %p258 = scmp.eq.s32.totalorder %s38, 5
      %p259 = por %p257, %p258
      %p261 = scmp.ne.s32.totalorder %s244, %s260
      %p262 = scmp.eq.s32.totalorder %s38, 0
      %p263 = por %p261, %p262
      %p264 = scmp.le.s32.totalorder 1, %s32
      %p265 = scmp.lt.s32.totalorder %s32, 7
      %p266 = pnand %p264, %p265
      %p267 = pneg %p266
      // Predicated region
      $region9: #{tpu_custom_call.1} parent=5 // pred_check
        _
      $region10: #{tpu_custom_call.1} parent=5 // pred_check_branch
        %269 = sbr.rel (%p266) target = $region12
      $region11: #{tpu_custom_call.1} parent=5 // pred_region
        %s270 = ssub.s32 %s32, 1
        // Predicated region
        $region13: #{tpu_custom_call.1} parent=11 // pred_check
          %p271 = pneg %p167
        $region14: #{tpu_custom_call.1} parent=11 // pred_check_branch
          %273 = sbr.rel (%p271) target = $region16
        $region15: #{tpu_custom_call.1} parent=11 // pred_region
          %s275 = ssub.s32 2048, 2048
          %276 = vsyncadd [#allocation13], %s275
          %s277 = sshll.u32 [#allocation12], 4
          %s278 = int_to_ptr.vmem [resolvable:$true] %s277
          %283 = dma.hbm_to_vmem [thread:$0]  %s5, 2048, %s278, [#allocation13], 128, 128, 8
        $region16: #{tpu_custom_call.1} parent=11 // pred_fallthru
          _
        // Predicated region
        $region17: #{tpu_custom_call.1} parent=11 // pred_check
          %p284 = pneg %p188
        $region18: #{tpu_custom_call.1} parent=11 // pred_check_branch
          %286 = sbr.rel (%p284) target = $region20
        $region19: #{tpu_custom_call.1} parent=11 // pred_region
          %s288 = ssub.s32 16, 16
          %289 = vsyncadd [#allocation13], %s288
          %s291 = sshll.u32 [#allocation14], 4
          %s292 = int_to_ptr.vmem [resolvable:$true] %s291
          %294 = dma.hbm_to_vmem [thread:$0]  %s6, 16, %s292, [#allocation13]
        $region20: #{tpu_custom_call.1} parent=11 // pred_fallthru
          _
        // Predicated region
        $region21: #{tpu_custom_call.1} parent=11 // pred_check
          %p295 = pneg %p209
        $region22: #{tpu_custom_call.1} parent=11 // pred_check_branch
          %297 = sbr.rel (%p295) target = $region24
        $region23: #{tpu_custom_call.1} parent=11 // pred_region
          %s299 = ssub.s32 2048, 2048
          %300 = vsyncadd [#allocation16], %s299
          %s301 = sshll.u32 [#allocation15], 4
          %s302 = int_to_ptr.vmem [resolvable:$true] %s301
          %307 = dma.hbm_to_vmem [thread:$0]  %s7, 2048, %s302, [#allocation16], 128, 128, 8
        $region24: #{tpu_custom_call.1} parent=11 // pred_fallthru
          _
        // Predicated region
        $region25: #{tpu_custom_call.1} parent=11 // pred_check
          %p308 = pneg %p230
        $region26: #{tpu_custom_call.1} parent=11 // pred_check_branch
          %310 = sbr.rel (%p308) target = $region28
        $region27: #{tpu_custom_call.1} parent=11 // pred_region
          %s312 = ssub.s32 16, 16
          %313 = vsyncadd [#allocation16], %s312
          %s315 = sshll.u32 [#allocation17], 4
          %s316 = int_to_ptr.vmem [resolvable:$true] %s315
          %318 = dma.hbm_to_vmem [thread:$0]  %s8, 16, %s316, [#allocation16]
        $region28: #{tpu_custom_call.1} parent=11 // pred_fallthru
          _
      $region12: #{tpu_custom_call.1} parent=5 // pred_fallthru
        _
      %p319 = scmp.lt.s32.totalorder %s32, 6
      // Predicated region
      $region29: #{tpu_custom_call.1} parent=5 // pred_check
        %p320 = pneg %p319
      $region30: #{tpu_custom_call.1} parent=5 // pred_check_branch
        %322 = sbr.rel (%p320) target = $region32
      $region31: #{tpu_custom_call.1} parent=5 // pred_region
        // Predicated region
        $region33: #{tpu_custom_call.1} parent=31 // pred_check
          %p323 = pneg %p76
        $region34: #{tpu_custom_call.1} parent=31 // pred_check_branch
          %325 = sbr.rel (%p323) target = $region36
        $region35: #{tpu_custom_call.1} parent=31 // pred_region
          %s326 = sand.u32 %s66, 1
          %s327 = scalar_lea.sflag [#allocation7], %s326
          %s328 = sand.u32 %s66, 1
          %s329 = smul.addr %s328, 4
          %s330 = scalar_lea.vmem [#allocation6], %s329
          %s331 = sld [smem:[#allocation4 + %s39]]
          %s332 = sld [smem:[#allocation5 + %s39]]
          %s333 = ssub.s32 %s332, 1
          %p334 = scmp.lt.s32.totalorder %s40, %s333
          %s335 = scalar_select %p334, %s40, %s333
          %s336 = sadd.s32 %s331, %s335
          %s337 = smul.u32 4, %s336
          %s339 = ssub.s32 64, 64
          %340 = vsyncadd %s327, %s339
          %s341 = smul.addr %s337, 16
          %s342 = scalar_lea.hbm %s2, %s341
          %s344 = sshll.u32 %s330, 4
          %s345 = int_to_ptr.vmem [resolvable:$true] %s344
          %347 = dma.hbm_to_vmem [thread:$0]  %s342, 64, %s345, %s327
        $region36: #{tpu_custom_call.1} parent=31 // pred_fallthru
          _
        // Predicated region
        $region37: #{tpu_custom_call.1} parent=31 // pred_check
          %p348 = pneg %p114
        $region38: #{tpu_custom_call.1} parent=31 // pred_check_branch
          %350 = sbr.rel (%p348) target = $region40
        $region39: #{tpu_custom_call.1} parent=31 // pred_region
          %s351 = sand.u32 %s32, 1
          %s352 = scalar_lea.sflag [#allocation10], %s351
          %s353 = sand.u32 %s104, 1
          %s354 = smul.addr %s353, 512
          %s355 = scalar_lea.vmem [#allocation9], %s354
          %s356 = sld [smem:[#allocation4 + %s39]]
          %s357 = sld [smem:[#allocation5 + %s39]]
          %s358 = ssub.s32 %s357, 1
          %p359 = scmp.lt.s32.totalorder %s40, %s358
          %s360 = scalar_select %p359, %s40, %s358
          %s361 = sadd.s32 %s356, %s360
          %s362 = smul.u32 64, %s361
          %s364 = ssub.s32 8192, 8192
          %365 = vsyncadd %s352, %s364
          %s366 = smul.addr %s362, 128
          %s367 = scalar_lea.hbm %s3, %s366
          %s368 = sshll.u32 %s355, 4
          %s369 = int_to_ptr.vmem [resolvable:$true] %s368
          %374 = dma.hbm_to_vmem [thread:$0]  %s367, 8192, %s369, %s352, 128, 128, 8
        $region40: #{tpu_custom_call.1} parent=31 // pred_fallthru
          _
        // Predicated region
        $region41: #{tpu_custom_call.1} parent=31 // pred_check
          %p375 = pneg %p140
        $region42: #{tpu_custom_call.1} parent=31 // pred_check_branch
          %377 = sbr.rel (%p375) target = $region44
        $region43: #{tpu_custom_call.1} parent=31 // pred_region
          %s378 = sand.u32 %s32, 1
          %s379 = scalar_lea.sflag [#allocation10], %s378
          %s380 = sand.u32 %s130, 1
          %s381 = smul.addr %s380, 256
          %s382 = scalar_lea.vmem [#allocation11], %s381
          %s383 = smul.u32 32, %s39
          %s385 = ssub.s32 4096, 4096
          %386 = vsyncadd %s379, %s385
          %s387 = smul.addr %s383, 128
          %s388 = scalar_lea.hbm %s4, %s387
          %s389 = sshll.u32 %s382, 4
          %s390 = int_to_ptr.vmem [resolvable:$true] %s389
          %395 = dma.hbm_to_vmem [thread:$0]  %s388, 4096, %s390, %s379, 128, 128, 8
        $region44: #{tpu_custom_call.1} parent=31 // pred_fallthru
          _
      $region32: #{tpu_custom_call.1} parent=5 // pred_fallthru
        _
      %p396 = scmp.le.s32.totalorder 1, %s32
      %p397 = scmp.lt.s32.totalorder %s32, 7
      %p398 = pnand %p396, %p397
      %p399 = pneg %p398
      // Predicated region
      $region45: #{tpu_custom_call.1} parent=5 // pred_check
        _
      $region46: #{tpu_custom_call.1} parent=5 // pred_check_branch
        %401 = sbr.rel (%p398) target = $region48
      $region47: #{tpu_custom_call.1} parent=5 // pred_region
        %s402 = ssub.s32 %s32, 1
        %s403 = sand.u32 %s69, 1
        %s404 = scalar_lea.sflag [#allocation7], %s403
        %s405 = sand.u32 %s69, 1
        %s406 = smul.addr %s405, 4
        %s407 = scalar_lea.vmem [#allocation6], %s406
        // Predicated region
        $region49: #{tpu_custom_call.1} parent=47 // pred_check
          %p408 = pneg %p82
        $region50: #{tpu_custom_call.1} parent=47 // pred_check_branch
          %410 = sbr.rel (%p408) target = $region52
        $region51: #{tpu_custom_call.1} parent=47 // pred_region
          %411 = dma.done %s404, 64
        $region52: #{tpu_custom_call.1} parent=47 // pred_fallthru
          _
        %s412 = sand.u32 %s37, 1
        %s413 = scalar_lea.sflag [#allocation10], %s412
        %s414 = sand.u32 %s107, 1
        %s415 = smul.addr %s414, 512
        %s416 = scalar_lea.vmem [#allocation9], %s415
        // Predicated region
        $region53: #{tpu_custom_call.1} parent=47 // pred_check
          %p417 = pneg %p120
        $region54: #{tpu_custom_call.1} parent=47 // pred_check_branch
          %419 = sbr.rel (%p417) target = $region56
        $region55: #{tpu_custom_call.1} parent=47 // pred_region
          %420 = dma.done %s413, 8192
        $region56: #{tpu_custom_call.1} parent=47 // pred_fallthru
          _
        %s421 = sand.u32 %s37, 1
        %s422 = scalar_lea.sflag [#allocation10], %s421
        %s423 = sand.u32 %s133, 1
        %s424 = smul.addr %s423, 256
        %s425 = scalar_lea.vmem [#allocation11], %s424
        // Predicated region
        $region57: #{tpu_custom_call.1} parent=47 // pred_check
          %p426 = pneg %p146
        $region58: #{tpu_custom_call.1} parent=47 // pred_check_branch
          %428 = sbr.rel (%p426) target = $region60
        $region59: #{tpu_custom_call.1} parent=47 // pred_region
          %429 = dma.done %s422, 4096
        $region60: #{tpu_custom_call.1} parent=47 // pred_fallthru
          _
        // Predicated region
        $region61: #{tpu_custom_call.1} parent=47 // pred_check
          %p430 = pneg %p167
        $region62: #{tpu_custom_call.1} parent=47 // pred_check_branch
          %432 = sbr.rel (%p430) target = $region64
        $region63: #{tpu_custom_call.1} parent=47 // pred_region
          %433 = dma.done [#allocation13], 2048
        $region64: #{tpu_custom_call.1} parent=47 // pred_fallthru
          _
        // Predicated region
        $region65: #{tpu_custom_call.1} parent=47 // pred_check
          %p434 = pneg %p188
        $region66: #{tpu_custom_call.1} parent=47 // pred_check_branch
          %436 = sbr.rel (%p434) target = $region68
        $region67: #{tpu_custom_call.1} parent=47 // pred_region
          %437 = dma.done [#allocation13], 16
        $region68: #{tpu_custom_call.1} parent=47 // pred_fallthru
          _
        // Predicated region
        $region69: #{tpu_custom_call.1} parent=47 // pred_check
          %p438 = pneg %p209
        $region70: #{tpu_custom_call.1} parent=47 // pred_check_branch
          %440 = sbr.rel (%p438) target = $region72
        $region71: #{tpu_custom_call.1} parent=47 // pred_region
          %441 = dma.done [#allocation16], 2048
        $region72: #{tpu_custom_call.1} parent=47 // pred_fallthru
          _
        // Predicated region
        $region73: #{tpu_custom_call.1} parent=47 // pred_check
          %p442 = pneg %p230
        $region74: #{tpu_custom_call.1} parent=47 // pred_check_branch
          %444 = sbr.rel (%p442) target = $region76
        $region75: #{tpu_custom_call.1} parent=47 // pred_region
          %445 = dma.done [#allocation16], 16
        $region76: #{tpu_custom_call.1} parent=47 // pred_fallthru
          _
        %s446 = sand.u32 %s69, 1
        %s447 = scalar_lea.sflag [#allocation7], %s446
        %s448 = sand.u32 %s69, 1
        %s449 = smul.addr %s448, 4
        %s450 = scalar_lea.vmem [#allocation6], %s449
        %p451 = pneg %p82
        %p452 = pneg %p79
        %s453 = sand.u32 %s37, 1
        %s454 = scalar_lea.sflag [#allocation10], %s453
        %s455 = sand.u32 %s107, 1
        %s456 = smul.addr %s455, 512
        %s457 = scalar_lea.vmem [#allocation9], %s456
        %p458 = pneg %p120
        %p459 = pneg %p117
        %s460 = sand.u32 %s37, 1
        %s461 = scalar_lea.sflag [#allocation10], %s460
        %s462 = sand.u32 %s133, 1
        %s463 = smul.addr %s462, 256
        %s464 = scalar_lea.vmem [#allocation11], %s463
        %p465 = pneg %p146
        %p466 = pneg %p143
        %p467 = pneg %p167
        %p468 = pneg %p164
        %p469 = pneg %p188
        %p470 = pneg %p185
        %p471 = pneg %p209
        %p472 = pneg %p206
        %p473 = pneg %p230
        %p474 = pneg %p227
        %p475 = pneg %p256
        %p476 = pneg %p253
        %s477 = sand.u32 %s243, 1
        %s478 = scalar_lea.sflag [#allocation8], %s477
        %s479 = sand.u32 %s243, 1
        %s480 = smul.addr %s479, 256
        %s481 = scalar_lea.vmem [#allocation18], %s480
        %s482 = sld [smem:[#allocation4 + %s41]]
        %s483 = sld [smem:[#allocation5 + %s41]]
        %s484 = ssub.s32 %s483, 1
        %p485 = scmp.lt.s32.totalorder %s42, %s484
        %s486 = scalar_select %p485, %s42, %s484
        %s487 = sadd.s32 %s482, %s486
        %s488 = smul.u32 4, %s487
        %s489 = sld [smem:[#allocation4 + %s41]]
        %s490 = sld [smem:[#allocation5 + %s41]]
        %s491 = ssub.s32 %s490, 1
        %p492 = scmp.lt.s32.totalorder %s42, %s491
        %s493 = scalar_select %p492, %s42, %s491
        %s494 = sadd.s32 %s489, %s493
        %s495 = smul.u32 64, %s494
        %s496 = smul.u32 32, %s41
        %s497 = smul.u32 32, %s41
        %s498 = sld [smem:[#allocation5 + %s41]]
        %p499 = scmp.eq.s32.totalorder %s42, 0
        // Predicated region
        $region77: #{tpu_custom_call.1} parent=47 // pred_check
          %p500 = pneg %p499
        $region78: #{tpu_custom_call.1} parent=47 // pred_check_branch
          %502 = sbr.rel (%p500) target = $region80
        $region79: #{tpu_custom_call.1} parent=47 // pred_region
          %503 = vst [vmem:[#allocation2] sm:$0xff] 0.0
          %504 = vst [vmem:[#allocation2 + $0x8] sm:$0xff] 0.0
          %505 = vst [vmem:[#allocation2 + $0x10] sm:$0xff] 0.0
          %506 = vst [vmem:[#allocation2 + $0x18] sm:$0xff] 0.0
          %507 = vst [vmem:[#allocation2 + $0x20] sm:$0xff] 0.0
          %508 = vst [vmem:[#allocation2 + $0x28] sm:$0xff] 0.0
          %509 = vst [vmem:[#allocation2 + $0x30] sm:$0xff] 0.0
          %510 = vst [vmem:[#allocation2 + $0x38] sm:$0xff] 0.0
          %511 = vst [vmem:[#allocation2 + $0x40] sm:$0xff] 0.0
          %512 = vst [vmem:[#allocation2 + $0x48] sm:$0xff] 0.0
          %513 = vst [vmem:[#allocation2 + $0x50] sm:$0xff] 0.0
          %514 = vst [vmem:[#allocation2 + $0x58] sm:$0xff] 0.0
          %515 = vst [vmem:[#allocation2 + $0x60] sm:$0xff] 0.0
          %516 = vst [vmem:[#allocation2 + $0x68] sm:$0xff] 0.0
          %517 = vst [vmem:[#allocation2 + $0x70] sm:$0xff] 0.0
          %518 = vst [vmem:[#allocation2 + $0x78] sm:$0xff] 0.0
          %519 = vst [vmem:[#allocation2 + $0x80] sm:$0xff] 0.0
          %520 = vst [vmem:[#allocation2 + $0x88] sm:$0xff] 0.0
          %521 = vst [vmem:[#allocation2 + $0x90] sm:$0xff] 0.0
          %522 = vst [vmem:[#allocation2 + $0x98] sm:$0xff] 0.0
          %523 = vst [vmem:[#allocation2 + $0xa0] sm:$0xff] 0.0
          %524 = vst [vmem:[#allocation2 + $0xa8] sm:$0xff] 0.0
          %525 = vst [vmem:[#allocation2 + $0xb0] sm:$0xff] 0.0
          %526 = vst [vmem:[#allocation2 + $0xb8] sm:$0xff] 0.0
          %527 = vst [vmem:[#allocation2 + $0xc0] sm:$0xff] 0.0
          %528 = vst [vmem:[#allocation2 + $0xc8] sm:$0xff] 0.0
          %529 = vst [vmem:[#allocation2 + $0xd0] sm:$0xff] 0.0
          %530 = vst [vmem:[#allocation2 + $0xd8] sm:$0xff] 0.0
          %531 = vst [vmem:[#allocation2 + $0xe0] sm:$0xff] 0.0
          %532 = vst [vmem:[#allocation2 + $0xe8] sm:$0xff] 0.0
          %533 = vst [vmem:[#allocation2 + $0xf0] sm:$0xff] 0.0
          %534 = vst [vmem:[#allocation2 + $0xf8] sm:$0xff] 0.0
        $region80: #{tpu_custom_call.1} parent=47 // pred_fallthru
          _
        %p535 = scmp.lt.s32.totalorder %s42, %s498
        // Predicated region
        $region81: #{tpu_custom_call.1} parent=47 // pred_check
          %p536 = pneg %p535
        $region82: #{tpu_custom_call.1} parent=47 // pred_check_branch
          %538 = sbr.rel (%p536) target = $region84
        $region83: #{tpu_custom_call.1} parent=47 // pred_region
          %v539 = vld [vmem:[%s407] sm:$0xf]
          %s540 = smul.u32 %s41, 256
          %v541 = vlaneseq
          %v542 = vshrl.u32 %v541, 7
          %v543 = vadd.s32 %v542, 8
          %v544 = vadd.s32 %v542, 16
          %v545 = vadd.s32 %v542, 24
          %v546 = vadd.s32 %v542, 32
          %v547 = vadd.s32 %v542, 40
          %v548 = vadd.s32 %v542, 48
          %v549 = vadd.s32 %v542, 56
          %v550 = vadd.s32 %v542, 64
          %v551 = vadd.s32 %v542, 72
          %v552 = vadd.s32 %v542, 80
          %v553 = vadd.s32 %v542, 88
          %v554 = vadd.s32 %v542, 96
          %v555 = vadd.s32 %v542, 104
          %v556 = vadd.s32 %v542, 112
          %v557 = vadd.s32 %v542, 120
          %v558 = vadd.s32 %v542, 128
          %v559 = vadd.s32 %v542, 136
          %v560 = vadd.s32 %v542, 144
          %v561 = vadd.s32 %v542, 152
          %v562 = vadd.s32 %v542, 160
          %v563 = vadd.s32 %v542, 168
          %v564 = vadd.s32 %v542, 176
          %v565 = vadd.s32 %v542, 184
          %v566 = vadd.s32 %v542, 192
          %v567 = vadd.s32 %v542, 200
          %v568 = vadd.s32 %v542, 208
          %v569 = vadd.s32 %v542, 216
          %v570 = vadd.s32 %v542, 224
          %v571 = vadd.s32 %v542, 232
          %v572 = vadd.s32 %v542, 240
          %v573 = vadd.s32 %v542, 248
          %v574 = vstv %s540
          %v575 = vadd.s32 %v574, %v542
          %v576 = vadd.s32 %v574, %v543
          %v577 = vadd.s32 %v574, %v544
          %v578 = vadd.s32 %v574, %v545
          %v579 = vadd.s32 %v574, %v546
          %v580 = vadd.s32 %v574, %v547
          %v581 = vadd.s32 %v574, %v548
          %v582 = vadd.s32 %v574, %v549
          %v583 = vadd.s32 %v574, %v550
          %v584 = vadd.s32 %v574, %v551
          %v585 = vadd.s32 %v574, %v552
          %v586 = vadd.s32 %v574, %v553
          %v587 = vadd.s32 %v574, %v554
          %v588 = vadd.s32 %v574, %v555
          %v589 = vadd.s32 %v574, %v556
          %v590 = vadd.s32 %v574, %v557
          %v591 = vadd.s32 %v574, %v558
          %v592 = vadd.s32 %v574, %v559
          %v593 = vadd.s32 %v574, %v560
          %v594 = vadd.s32 %v574, %v561
          %v595 = vadd.s32 %v574, %v562
          %v596 = vadd.s32 %v574, %v563
          %v597 = vadd.s32 %v574, %v564
          %v598 = vadd.s32 %v574, %v565
          %v599 = vadd.s32 %v574, %v566
          %v600 = vadd.s32 %v574, %v567
          %v601 = vadd.s32 %v574, %v568
          %v602 = vadd.s32 %v574, %v569
          %v603 = vadd.s32 %v574, %v570
          %v604 = vadd.s32 %v574, %v571
          %v605 = vadd.s32 %v574, %v572
          %v606 = vadd.s32 %v574, %v573
          %v607 = vlaneseq
          %v608 = vshrl.u32 %v607, 7
          %v609 = vsub.s32 0, %v608
          %v610 = vrot.slane %v539, %v609
          %v611 = vlaneseq
          %v612 = vshrl.u32 %v611, 7
          %v613 = vsub.s32 1, %v612
          %v614 = vrot.slane %v539, %v613
          %v615 = vlaneseq
          %v616 = vshrl.u32 %v615, 7
          %v617 = vsub.s32 2, %v616
          %v618 = vrot.slane %v539, %v617
          %v619 = vlaneseq
          %v620 = vshrl.u32 %v619, 7
          %v621 = vsub.s32 3, %v620
          %v622 = vrot.slane %v539, %v621
          %vm623 = vcmp.eq.s32.totalorder %v575, %v610
          %vm624 = vcmp.eq.s32.totalorder %v575, %v614
          %vm625 = vcmp.eq.s32.totalorder %v575, %v618
          %vm626 = vcmp.eq.s32.totalorder %v575, %v622
          %vm627 = vcmp.eq.s32.totalorder %v576, %v610
          %vm628 = vcmp.eq.s32.totalorder %v576, %v614
          %vm629 = vcmp.eq.s32.totalorder %v576, %v618
          %vm630 = vcmp.eq.s32.totalorder %v576, %v622
          %vm631 = vcmp.eq.s32.totalorder %v577, %v610
          %vm632 = vcmp.eq.s32.totalorder %v577, %v614
          %vm633 = vcmp.eq.s32.totalorder %v577, %v618
          %vm634 = vcmp.eq.s32.totalorder %v577, %v622
          %vm635 = vcmp.eq.s32.totalorder %v578, %v610
          %vm636 = vcmp.eq.s32.totalorder %v578, %v614
          %vm637 = vcmp.eq.s32.totalorder %v578, %v618
          %vm638 = vcmp.eq.s32.totalorder %v578, %v622
          %vm639 = vcmp.eq.s32.totalorder %v579, %v610
          %vm640 = vcmp.eq.s32.totalorder %v579, %v614
          %vm641 = vcmp.eq.s32.totalorder %v579, %v618
          %vm642 = vcmp.eq.s32.totalorder %v579, %v622
          %vm643 = vcmp.eq.s32.totalorder %v580, %v610
          %vm644 = vcmp.eq.s32.totalorder %v580, %v614
          %vm645 = vcmp.eq.s32.totalorder %v580, %v618
          %vm646 = vcmp.eq.s32.totalorder %v580, %v622
          %vm647 = vcmp.eq.s32.totalorder %v581, %v610
          %vm648 = vcmp.eq.s32.totalorder %v581, %v614
          %vm649 = vcmp.eq.s32.totalorder %v581, %v618
          %vm650 = vcmp.eq.s32.totalorder %v581, %v622
          %vm651 = vcmp.eq.s32.totalorder %v582, %v610
          %vm652 = vcmp.eq.s32.totalorder %v582, %v614
          %vm653 = vcmp.eq.s32.totalorder %v582, %v618
          %vm654 = vcmp.eq.s32.totalorder %v582, %v622
          %vm655 = vcmp.eq.s32.totalorder %v583, %v610
          %vm656 = vcmp.eq.s32.totalorder %v583, %v614
          %vm657 = vcmp.eq.s32.totalorder %v583, %v618
          %vm658 = vcmp.eq.s32.totalorder %v583, %v622
          %vm659 = vcmp.eq.s32.totalorder %v584, %v610
          %vm660 = vcmp.eq.s32.totalorder %v584, %v614
          %vm661 = vcmp.eq.s32.totalorder %v584, %v618
          %vm662 = vcmp.eq.s32.totalorder %v584, %v622
          %vm663 = vcmp.eq.s32.totalorder %v585, %v610
          %vm664 = vcmp.eq.s32.totalorder %v585, %v614
          %vm665 = vcmp.eq.s32.totalorder %v585, %v618
          %vm666 = vcmp.eq.s32.totalorder %v585, %v622
          %vm667 = vcmp.eq.s32.totalorder %v586, %v610
          %vm668 = vcmp.eq.s32.totalorder %v586, %v614
          %vm669 = vcmp.eq.s32.totalorder %v586, %v618
          %vm670 = vcmp.eq.s32.totalorder %v586, %v622
          %vm671 = vcmp.eq.s32.totalorder %v587, %v610
          %vm672 = vcmp.eq.s32.totalorder %v587, %v614
          %vm673 = vcmp.eq.s32.totalorder %v587, %v618
          %vm674 = vcmp.eq.s32.totalorder %v587, %v622
          %vm675 = vcmp.eq.s32.totalorder %v588, %v610
          %vm676 = vcmp.eq.s32.totalorder %v588, %v614
          %vm677 = vcmp.eq.s32.totalorder %v588, %v618
          %vm678 = vcmp.eq.s32.totalorder %v588, %v622
          %vm679 = vcmp.eq.s32.totalorder %v589, %v610
          %vm680 = vcmp.eq.s32.totalorder %v589, %v614
          %vm681 = vcmp.eq.s32.totalorder %v589, %v618
          %vm682 = vcmp.eq.s32.totalorder %v589, %v622
          %vm683 = vcmp.eq.s32.totalorder %v590, %v610
          %vm684 = vcmp.eq.s32.totalorder %v590, %v614
          %vm685 = vcmp.eq.s32.totalorder %v590, %v618
          %vm686 = vcmp.eq.s32.totalorder %v590, %v622
          %vm687 = vcmp.eq.s32.totalorder %v591, %v610
          %vm688 = vcmp.eq.s32.totalorder %v591, %v614
          %vm689 = vcmp.eq.s32.totalorder %v591, %v618
          %vm690 = vcmp.eq.s32.totalorder %v591, %v622
          %vm691 = vcmp.eq.s32.totalorder %v592, %v610
          %vm692 = vcmp.eq.s32.totalorder %v592, %v614
          %vm693 = vcmp.eq.s32.totalorder %v592, %v618
          %vm694 = vcmp.eq.s32.totalorder %v592, %v622
          %vm695 = vcmp.eq.s32.totalorder %v593, %v610
          %vm696 = vcmp.eq.s32.totalorder %v593, %v614
          %vm697 = vcmp.eq.s32.totalorder %v593, %v618
          %vm698 = vcmp.eq.s32.totalorder %v593, %v622
          %vm699 = vcmp.eq.s32.totalorder %v594, %v610
          %vm700 = vcmp.eq.s32.totalorder %v594, %v614
          %vm701 = vcmp.eq.s32.totalorder %v594, %v618
          %vm702 = vcmp.eq.s32.totalorder %v594, %v622
          %vm703 = vcmp.eq.s32.totalorder %v595, %v610
          %vm704 = vcmp.eq.s32.totalorder %v595, %v614
          %vm705 = vcmp.eq.s32.totalorder %v595, %v618
          %vm706 = vcmp.eq.s32.totalorder %v595, %v622
          %vm707 = vcmp.eq.s32.totalorder %v596, %v610
          %vm708 = vcmp.eq.s32.totalorder %v596, %v614
          %vm709 = vcmp.eq.s32.totalorder %v596, %v618
          %vm710 = vcmp.eq.s32.totalorder %v596, %v622
          %vm711 = vcmp.eq.s32.totalorder %v597, %v610
          %vm712 = vcmp.eq.s32.totalorder %v597, %v614
          %vm713 = vcmp.eq.s32.totalorder %v597, %v618
          %vm714 = vcmp.eq.s32.totalorder %v597, %v622
          %vm715 = vcmp.eq.s32.totalorder %v598, %v610
          %vm716 = vcmp.eq.s32.totalorder %v598, %v614
          %vm717 = vcmp.eq.s32.totalorder %v598, %v618
          %vm718 = vcmp.eq.s32.totalorder %v598, %v622
          %vm719 = vcmp.eq.s32.totalorder %v599, %v610
          %vm720 = vcmp.eq.s32.totalorder %v599, %v614
          %vm721 = vcmp.eq.s32.totalorder %v599, %v618
          %vm722 = vcmp.eq.s32.totalorder %v599, %v622
          %vm723 = vcmp.eq.s32.totalorder %v600, %v610
          %vm724 = vcmp.eq.s32.totalorder %v600, %v614
          %vm725 = vcmp.eq.s32.totalorder %v600, %v618
          %vm726 = vcmp.eq.s32.totalorder %v600, %v622
          %vm727 = vcmp.eq.s32.totalorder %v601, %v610
          %vm728 = vcmp.eq.s32.totalorder %v601, %v614
          %vm729 = vcmp.eq.s32.totalorder %v601, %v618
          %vm730 = vcmp.eq.s32.totalorder %v601, %v622
          %vm731 = vcmp.eq.s32.totalorder %v602, %v610
          %vm732 = vcmp.eq.s32.totalorder %v602, %v614
          %vm733 = vcmp.eq.s32.totalorder %v602, %v618
          %vm734 = vcmp.eq.s32.totalorder %v602, %v622
          %vm735 = vcmp.eq.s32.totalorder %v603, %v610
          %vm736 = vcmp.eq.s32.totalorder %v603, %v614
          %vm737 = vcmp.eq.s32.totalorder %v603, %v618
          %vm738 = vcmp.eq.s32.totalorder %v603, %v622
          %vm739 = vcmp.eq.s32.totalorder %v604, %v610
          %vm740 = vcmp.eq.s32.totalorder %v604, %v614
          %vm741 = vcmp.eq.s32.totalorder %v604, %v618
          %vm742 = vcmp.eq.s32.totalorder %v604, %v622
          %vm743 = vcmp.eq.s32.totalorder %v605, %v610
          %vm744 = vcmp.eq.s32.totalorder %v605, %v614
          %vm745 = vcmp.eq.s32.totalorder %v605, %v618
          %vm746 = vcmp.eq.s32.totalorder %v605, %v622
          %vm747 = vcmp.eq.s32.totalorder %v606, %v610
          %vm748 = vcmp.eq.s32.totalorder %v606, %v614
          %vm749 = vcmp.eq.s32.totalorder %v606, %v618
          %vm750 = vcmp.eq.s32.totalorder %v606, %v622
          %v751 = vsel %vm623, 1, 0
          %v752 = vsel %vm624, 1, 0
          %v753 = vsel %vm625, 1, 0
          %v754 = vsel %vm626, 1, 0
          %v755 = vsel %vm627, 1, 0
          %v756 = vsel %vm628, 1, 0
          %v757 = vsel %vm629, 1, 0
          %v758 = vsel %vm630, 1, 0
          %v759 = vsel %vm631, 1, 0
          %v760 = vsel %vm632, 1, 0
          %v761 = vsel %vm633, 1, 0
          %v762 = vsel %vm634, 1, 0
          %v763 = vsel %vm635, 1, 0
          %v764 = vsel %vm636, 1, 0
          %v765 = vsel %vm637, 1, 0
          %v766 = vsel %vm638, 1, 0
          %v767 = vsel %vm639, 1, 0
          %v768 = vsel %vm640, 1, 0
          %v769 = vsel %vm641, 1, 0
          %v770 = vsel %vm642, 1, 0
          %v771 = vsel %vm643, 1, 0
          %v772 = vsel %vm644, 1, 0
          %v773 = vsel %vm645, 1, 0
          %v774 = vsel %vm646, 1, 0
          %v775 = vsel %vm647, 1, 0
          %v776 = vsel %vm648, 1, 0
          %v777 = vsel %vm649, 1, 0
          %v778 = vsel %vm650, 1, 0
          %v779 = vsel %vm651, 1, 0
          %v780 = vsel %vm652, 1, 0
          %v781 = vsel %vm653, 1, 0
          %v782 = vsel %vm654, 1, 0
          %v783 = vsel %vm655, 1, 0
          %v784 = vsel %vm656, 1, 0
          %v785 = vsel %vm657, 1, 0
          %v786 = vsel %vm658, 1, 0
          %v787 = vsel %vm659, 1, 0
          %v788 = vsel %vm660, 1, 0
          %v789 = vsel %vm661, 1, 0
          %v790 = vsel %vm662, 1, 0
          %v791 = vsel %vm663, 1, 0
          %v792 = vsel %vm664, 1, 0
          %v793 = vsel %vm665, 1, 0
          %v794 = vsel %vm666, 1, 0
          %v795 = vsel %vm667, 1, 0
          %v796 = vsel %vm668, 1, 0
          %v797 = vsel %vm669, 1, 0
          %v798 = vsel %vm670, 1, 0
          %v799 = vsel %vm671, 1, 0
          %v800 = vsel %vm672, 1, 0
          %v801 = vsel %vm673, 1, 0
          %v802 = vsel %vm674, 1, 0
          %v803 = vsel %vm675, 1, 0
          %v804 = vsel %vm676, 1, 0
          %v805 = vsel %vm677, 1, 0
          %v806 = vsel %vm678, 1, 0
          %v807 = vsel %vm679, 1, 0
          %v808 = vsel %vm680, 1, 0
          %v809 = vsel %vm681, 1, 0
          %v810 = vsel %vm682, 1, 0
          %v811 = vsel %vm683, 1, 0
          %v812 = vsel %vm684, 1, 0
          %v813 = vsel %vm685, 1, 0
          %v814 = vsel %vm686, 1, 0
          %v815 = vsel %vm687, 1, 0
          %v816 = vsel %vm688, 1, 0
          %v817 = vsel %vm689, 1, 0
          %v818 = vsel %vm690, 1, 0
          %v819 = vsel %vm691, 1, 0
          %v820 = vsel %vm692, 1, 0
          %v821 = vsel %vm693, 1, 0
          %v822 = vsel %vm694, 1, 0
          %v823 = vsel %vm695, 1, 0
          %v824 = vsel %vm696, 1, 0
          %v825 = vsel %vm697, 1, 0
          %v826 = vsel %vm698, 1, 0
          %v827 = vsel %vm699, 1, 0
          %v828 = vsel %vm700, 1, 0
          %v829 = vsel %vm701, 1, 0
          %v830 = vsel %vm702, 1, 0
          %v831 = vsel %vm703, 1, 0
          %v832 = vsel %vm704, 1, 0
          %v833 = vsel %vm705, 1, 0
          %v834 = vsel %vm706, 1, 0
          %v835 = vsel %vm707, 1, 0
          %v836 = vsel %vm708, 1, 0
          %v837 = vsel %vm709, 1, 0
          %v838 = vsel %vm710, 1, 0
          %v839 = vsel %vm711, 1, 0
          %v840 = vsel %vm712, 1, 0
          %v841 = vsel %vm713, 1, 0
          %v842 = vsel %vm714, 1, 0
          %v843 = vsel %vm715, 1, 0
          %v844 = vsel %vm716, 1, 0
          %v845 = vsel %vm717, 1, 0
          %v846 = vsel %vm718, 1, 0
          %v847 = vsel %vm719, 1, 0
          %v848 = vsel %vm720, 1, 0
          %v849 = vsel %vm721, 1, 0
          %v850 = vsel %vm722, 1, 0
          %v851 = vsel %vm723, 1, 0
          %v852 = vsel %vm724, 1, 0
          %v853 = vsel %vm725, 1, 0
          %v854 = vsel %vm726, 1, 0
          %v855 = vsel %vm727, 1, 0
          %v856 = vsel %vm728, 1, 0
          %v857 = vsel %vm729, 1, 0
          %v858 = vsel %vm730, 1, 0
          %v859 = vsel %vm731, 1, 0
          %v860 = vsel %vm732, 1, 0
          %v861 = vsel %vm733, 1, 0
          %v862 = vsel %vm734, 1, 0
          %v863 = vsel %vm735, 1, 0
          %v864 = vsel %vm736, 1, 0
          %v865 = vsel %vm737, 1, 0
          %v866 = vsel %vm738, 1, 0
          %v867 = vsel %vm739, 1, 0
          %v868 = vsel %vm740, 1, 0
          %v869 = vsel %vm741, 1, 0
          %v870 = vsel %vm742, 1, 0
          %v871 = vsel %vm743, 1, 0
          %v872 = vsel %vm744, 1, 0
          %v873 = vsel %vm745, 1, 0
          %v874 = vsel %vm746, 1, 0
          %v875 = vsel %vm747, 1, 0
          %v876 = vsel %vm748, 1, 0
          %v877 = vsel %vm749, 1, 0
          %v878 = vsel %vm750, 1, 0
          %v879 = vcvt.s32.f32 %v751
          %v880 = vcvt.s32.f32 %v752
          %v881 = vcvt.s32.f32 %v753
          %v882 = vcvt.s32.f32 %v754
          %v883 = vcvt.s32.f32 %v755
          %v884 = vcvt.s32.f32 %v756
          %v885 = vcvt.s32.f32 %v757
          %v886 = vcvt.s32.f32 %v758
          %v887 = vcvt.s32.f32 %v759
          %v888 = vcvt.s32.f32 %v760
          %v889 = vcvt.s32.f32 %v761
          %v890 = vcvt.s32.f32 %v762
          %v891 = vcvt.s32.f32 %v763
          %v892 = vcvt.s32.f32 %v764
          %v893 = vcvt.s32.f32 %v765
          %v894 = vcvt.s32.f32 %v766
          %v895 = vcvt.s32.f32 %v767
          %v896 = vcvt.s32.f32 %v768
          %v897 = vcvt.s32.f32 %v769
          %v898 = vcvt.s32.f32 %v770
          %v899 = vcvt.s32.f32 %v771
          %v900 = vcvt.s32.f32 %v772
          %v901 = vcvt.s32.f32 %v773
          %v902 = vcvt.s32.f32 %v774
          %v903 = vcvt.s32.f32 %v775
          %v904 = vcvt.s32.f32 %v776
          %v905 = vcvt.s32.f32 %v777
          %v906 = vcvt.s32.f32 %v778
          %v907 = vcvt.s32.f32 %v779
          %v908 = vcvt.s32.f32 %v780
          %v909 = vcvt.s32.f32 %v781
          %v910 = vcvt.s32.f32 %v782
          %v911 = vcvt.s32.f32 %v783
          %v912 = vcvt.s32.f32 %v784
          %v913 = vcvt.s32.f32 %v785
          %v914 = vcvt.s32.f32 %v786
          %v915 = vcvt.s32.f32 %v787
          %v916 = vcvt.s32.f32 %v788
          %v917 = vcvt.s32.f32 %v789
          %v918 = vcvt.s32.f32 %v790
          %v919 = vcvt.s32.f32 %v791
          %v920 = vcvt.s32.f32 %v792
          %v921 = vcvt.s32.f32 %v793
          %v922 = vcvt.s32.f32 %v794
          %v923 = vcvt.s32.f32 %v795
          %v924 = vcvt.s32.f32 %v796
          %v925 = vcvt.s32.f32 %v797
          %v926 = vcvt.s32.f32 %v798
          %v927 = vcvt.s32.f32 %v799
          %v928 = vcvt.s32.f32 %v800
          %v929 = vcvt.s32.f32 %v801
          %v930 = vcvt.s32.f32 %v802
          %v931 = vcvt.s32.f32 %v803
          %v932 = vcvt.s32.f32 %v804
          %v933 = vcvt.s32.f32 %v805
          %v934 = vcvt.s32.f32 %v806
          %v935 = vcvt.s32.f32 %v807
          %v936 = vcvt.s32.f32 %v808
          %v937 = vcvt.s32.f32 %v809
          %v938 = vcvt.s32.f32 %v810
          %v939 = vcvt.s32.f32 %v811
          %v940 = vcvt.s32.f32 %v812
          %v941 = vcvt.s32.f32 %v813
          %v942 = vcvt.s32.f32 %v814
          %v943 = vcvt.s32.f32 %v815
          %v944 = vcvt.s32.f32 %v816
          %v945 = vcvt.s32.f32 %v817
          %v946 = vcvt.s32.f32 %v818
          %v947 = vcvt.s32.f32 %v819
          %v948 = vcvt.s32.f32 %v820
          %v949 = vcvt.s32.f32 %v821
          %v950 = vcvt.s32.f32 %v822
          %v951 = vcvt.s32.f32 %v823
          %v952 = vcvt.s32.f32 %v824
          %v953 = vcvt.s32.f32 %v825
          %v954 = vcvt.s32.f32 %v826
          %v955 = vcvt.s32.f32 %v827
          %v956 = vcvt.s32.f32 %v828
          %v957 = vcvt.s32.f32 %v829
          %v958 = vcvt.s32.f32 %v830
          %v959 = vcvt.s32.f32 %v831
          %v960 = vcvt.s32.f32 %v832
          %v961 = vcvt.s32.f32 %v833
          %v962 = vcvt.s32.f32 %v834
          %v963 = vcvt.s32.f32 %v835
          %v964 = vcvt.s32.f32 %v836
          %v965 = vcvt.s32.f32 %v837
          %v966 = vcvt.s32.f32 %v838
          %v967 = vcvt.s32.f32 %v839
          %v968 = vcvt.s32.f32 %v840
          %v969 = vcvt.s32.f32 %v841
          %v970 = vcvt.s32.f32 %v842
          %v971 = vcvt.s32.f32 %v843
          %v972 = vcvt.s32.f32 %v844
          %v973 = vcvt.s32.f32 %v845
          %v974 = vcvt.s32.f32 %v846
          %v975 = vcvt.s32.f32 %v847
          %v976 = vcvt.s32.f32 %v848
          %v977 = vcvt.s32.f32 %v849
          %v978 = vcvt.s32.f32 %v850
          %v979 = vcvt.s32.f32 %v851
          %v980 = vcvt.s32.f32 %v852
          %v981 = vcvt.s32.f32 %v853
          %v982 = vcvt.s32.f32 %v854
          %v983 = vcvt.s32.f32 %v855
          %v984 = vcvt.s32.f32 %v856
          %v985 = vcvt.s32.f32 %v857
          %v986 = vcvt.s32.f32 %v858
          %v987 = vcvt.s32.f32 %v859
          %v988 = vcvt.s32.f32 %v860
          %v989 = vcvt.s32.f32 %v861
          %v990 = vcvt.s32.f32 %v862
          %v991 = vcvt.s32.f32 %v863
          %v992 = vcvt.s32.f32 %v864
          %v993 = vcvt.s32.f32 %v865
          %v994 = vcvt.s32.f32 %v866
          %v995 = vcvt.s32.f32 %v867
          %v996 = vcvt.s32.f32 %v868
          %v997 = vcvt.s32.f32 %v869
          %v998 = vcvt.s32.f32 %v870
          %v999 = vcvt.s32.f32 %v871
          %v1000 = vcvt.s32.f32 %v872
          %v1001 = vcvt.s32.f32 %v873
          %v1002 = vcvt.s32.f32 %v874
          %v1003 = vcvt.s32.f32 %v875
          %v1004 = vcvt.s32.f32 %v876
          %v1005 = vcvt.s32.f32 %v877
          %v1006 = vcvt.s32.f32 %v878
          %v1007 = vld [vmem:[#allocation2] sm:$0xff]
          %v1008 = vld [vmem:[#allocation2 + $0x8] sm:$0xff]
          %v1009 = vld [vmem:[#allocation2 + $0x10] sm:$0xff]
          %v1010 = vld [vmem:[#allocation2 + $0x18] sm:$0xff]
          %v1011 = vld [vmem:[#allocation2 + $0x20] sm:$0xff]
          %v1012 = vld [vmem:[#allocation2 + $0x28] sm:$0xff]
          %v1013 = vld [vmem:[#allocation2 + $0x30] sm:$0xff]
          %v1014 = vld [vmem:[#allocation2 + $0x38] sm:$0xff]
          %v1015 = vld [vmem:[#allocation2 + $0x40] sm:$0xff]
          %v1016 = vld [vmem:[#allocation2 + $0x48] sm:$0xff]
          %v1017 = vld [vmem:[#allocation2 + $0x50] sm:$0xff]
          %v1018 = vld [vmem:[#allocation2 + $0x58] sm:$0xff]
          %v1019 = vld [vmem:[#allocation2 + $0x60] sm:$0xff]
          %v1020 = vld [vmem:[#allocation2 + $0x68] sm:$0xff]
          %v1021 = vld [vmem:[#allocation2 + $0x70] sm:$0xff]
          %v1022 = vld [vmem:[#allocation2 + $0x78] sm:$0xff]
          %v1023 = vld [vmem:[#allocation2 + $0x80] sm:$0xff]
          %v1024 = vld [vmem:[#allocation2 + $0x88] sm:$0xff]
          %v1025 = vld [vmem:[#allocation2 + $0x90] sm:$0xff]
          %v1026 = vld [vmem:[#allocation2 + $0x98] sm:$0xff]
          %v1027 = vld [vmem:[#allocation2 + $0xa0] sm:$0xff]
          %v1028 = vld [vmem:[#allocation2 + $0xa8] sm:$0xff]
          %v1029 = vld [vmem:[#allocation2 + $0xb0] sm:$0xff]
          %v1030 = vld [vmem:[#allocation2 + $0xb8] sm:$0xff]
          %v1031 = vld [vmem:[#allocation2 + $0xc0] sm:$0xff]
          %v1032 = vld [vmem:[#allocation2 + $0xc8] sm:$0xff]
          %v1033 = vld [vmem:[#allocation2 + $0xd0] sm:$0xff]
          %v1034 = vld [vmem:[#allocation2 + $0xd8] sm:$0xff]
          %v1035 = vld [vmem:[#allocation2 + $0xe0] sm:$0xff]
          %v1036 = vld [vmem:[#allocation2 + $0xe8] sm:$0xff]
          %v1037 = vld [vmem:[#allocation2 + $0xf0] sm:$0xff]
          %v1038 = vld [vmem:[#allocation2 + $0xf8] sm:$0xff]
          %v1039 = vld [vmem:[%s416] sm:$0xff]
          %v1040 = vld [vmem:[%s416 + $0x8] sm:$0xff]
          %v1041 = vld [vmem:[%s416 + $0x10] sm:$0xff]
          %v1042 = vld [vmem:[%s416 + $0x18] sm:$0xff]
          %v1043 = vld [vmem:[%s416 + $0x20] sm:$0xff]
          %v1044 = vld [vmem:[%s416 + $0x28] sm:$0xff]
          %v1045 = vld [vmem:[%s416 + $0x30] sm:$0xff]
          %v1046 = vld [vmem:[%s416 + $0x38] sm:$0xff]
          %v1047 = vld [vmem:[%s416 + $0x40] sm:$0xff]
          %v1048 = vld [vmem:[%s416 + $0x48] sm:$0xff]
          %v1049 = vld [vmem:[%s416 + $0x50] sm:$0xff]
          %v1050 = vld [vmem:[%s416 + $0x58] sm:$0xff]
          %v1051 = vld [vmem:[%s416 + $0x60] sm:$0xff]
          %v1052 = vld [vmem:[%s416 + $0x68] sm:$0xff]
          %v1053 = vld [vmem:[%s416 + $0x70] sm:$0xff]
          %v1054 = vld [vmem:[%s416 + $0x78] sm:$0xff]
          %v1055 = vld [vmem:[%s416 + $0x80] sm:$0xff]
          %v1056 = vld [vmem:[%s416 + $0x88] sm:$0xff]
          %v1057 = vld [vmem:[%s416 + $0x90] sm:$0xff]
          %v1058 = vld [vmem:[%s416 + $0x98] sm:$0xff]
          %v1059 = vld [vmem:[%s416 + $0xa0] sm:$0xff]
          %v1060 = vld [vmem:[%s416 + $0xa8] sm:$0xff]
          %v1061 = vld [vmem:[%s416 + $0xb0] sm:$0xff]
          %v1062 = vld [vmem:[%s416 + $0xb8] sm:$0xff]
          %v1063 = vld [vmem:[%s416 + $0xc0] sm:$0xff]
          %v1064 = vld [vmem:[%s416 + $0xc8] sm:$0xff]
          %v1065 = vld [vmem:[%s416 + $0xd0] sm:$0xff]
          %v1066 = vld [vmem:[%s416 + $0xd8] sm:$0xff]
          %v1067 = vld [vmem:[%s416 + $0xe0] sm:$0xff]
          %v1068 = vld [vmem:[%s416 + $0xe8] sm:$0xff]
          %v1069 = vld [vmem:[%s416 + $0xf0] sm:$0xff]
          %v1070 = vld [vmem:[%s416 + $0xf8] sm:$0xff]
          %v1071 = vld [vmem:[%s416 + $0x100] sm:$0xff]
          %v1072 = vld [vmem:[%s416 + $0x108] sm:$0xff]
          %v1073 = vld [vmem:[%s416 + $0x110] sm:$0xff]
          %v1074 = vld [vmem:[%s416 + $0x118] sm:$0xff]
          %v1075 = vld [vmem:[%s416 + $0x120] sm:$0xff]
          %v1076 = vld [vmem:[%s416 + $0x128] sm:$0xff]
          %v1077 = vld [vmem:[%s416 + $0x130] sm:$0xff]
          %v1078 = vld [vmem:[%s416 + $0x138] sm:$0xff]
          %v1079 = vld [vmem:[%s416 + $0x140] sm:$0xff]
          %v1080 = vld [vmem:[%s416 + $0x148] sm:$0xff]
          %v1081 = vld [vmem:[%s416 + $0x150] sm:$0xff]
          %v1082 = vld [vmem:[%s416 + $0x158] sm:$0xff]
          %v1083 = vld [vmem:[%s416 + $0x160] sm:$0xff]
          %v1084 = vld [vmem:[%s416 + $0x168] sm:$0xff]
          %v1085 = vld [vmem:[%s416 + $0x170] sm:$0xff]
          %v1086 = vld [vmem:[%s416 + $0x178] sm:$0xff]
          %v1087 = vld [vmem:[%s416 + $0x180] sm:$0xff]
          %v1088 = vld [vmem:[%s416 + $0x188] sm:$0xff]
          %v1089 = vld [vmem:[%s416 + $0x190] sm:$0xff]
          %v1090 = vld [vmem:[%s416 + $0x198] sm:$0xff]
          %v1091 = vld [vmem:[%s416 + $0x1a0] sm:$0xff]
          %v1092 = vld [vmem:[%s416 + $0x1a8] sm:$0xff]
          %v1093 = vld [vmem:[%s416 + $0x1b0] sm:$0xff]
          %v1094 = vld [vmem:[%s416 + $0x1b8] sm:$0xff]
          %v1095 = vld [vmem:[%s416 + $0x1c0] sm:$0xff]
          %v1096 = vld [vmem:[%s416 + $0x1c8] sm:$0xff]
          %v1097 = vld [vmem:[%s416 + $0x1d0] sm:$0xff]
          %v1098 = vld [vmem:[%s416 + $0x1d8] sm:$0xff]
          %v1099 = vld [vmem:[%s416 + $0x1e0] sm:$0xff]
          %v1100 = vld [vmem:[%s416 + $0x1e8] sm:$0xff]
          %v1101 = vld [vmem:[%s416 + $0x1f0] sm:$0xff]
          %v1102 = vld [vmem:[%s416 + $0x1f8] sm:$0xff]
          %1103 = vmatprep.subr.mxu0 0.0
          %1104 = vmatpush1.msra.mxu0 %v1039
          %1105 = vmatprep.subr.mxu0 0.0
          %1106 = vmatpush1.msra.mxu0 %v1040
          %1107 = vmatprep.subr.mxu0 0.0
          %1108 = vmatpush1.msra.mxu0 %v1041
          %1109 = vmatprep.subr.mxu0 0.0
          %1110 = vmatpush1.msra.mxu0 %v1042
          %1111 = vmatprep.subr.mxu0 0.0
          %1112 = vmatpush1.msra.mxu0 %v1043
          %1113 = vmatprep.subr.mxu0 0.0
          %1114 = vmatpush1.msra.mxu0 %v1044
          %1115 = vmatprep.subr.mxu0 0.0
          %1116 = vmatpush1.msra.mxu0 %v1045
          %1117 = vmatprep.subr.mxu0 0.0
          %1118 = vmatpush1.msra.mxu0 %v1046
          %1119 = vmatprep.subr.mxu0 0.0
          %1120 = vmatpush1.msra.mxu0 %v1047
          %1121 = vmatprep.subr.mxu0 0.0
          %1122 = vmatpush1.msra.mxu0 %v1048
          %1123 = vmatprep.subr.mxu0 0.0
          %1124 = vmatpush1.msra.mxu0 %v1049
          %1125 = vmatprep.subr.mxu0 0.0
          %1126 = vmatpush1.msra.mxu0 %v1050
          %1127 = vmatprep.subr.mxu0 0.0
          %1128 = vmatpush1.msra.mxu0 %v1051
          %1129 = vmatprep.subr.mxu0 0.0
          %1130 = vmatpush1.msra.mxu0 %v1052
          %1131 = vmatprep.subr.mxu0 0.0
          %1132 = vmatpush1.msra.mxu0 %v1053
          %1133 = vmatprep.subr.mxu0 0.0
          %1134 = vmatpush1.msra.mxu0 %v1054
          %1135 = vmatprep.subr.mxu0 0.0
          %1136 = vmatpush1.msra.mxu0 %v1055
          %1137 = vmatprep.subr.mxu0 0.0
          %1138 = vmatpush1.msra.mxu0 %v1056
          %1139 = vmatprep.subr.mxu0 0.0
          %1140 = vmatpush1.msra.mxu0 %v1057
          %1141 = vmatprep.subr.mxu0 0.0
          %1142 = vmatpush1.msra.mxu0 %v1058
          %1143 = vmatprep.subr.mxu0 0.0
          %1144 = vmatpush1.msra.mxu0 %v1059
          %1145 = vmatprep.subr.mxu0 0.0
          %1146 = vmatpush1.msra.mxu0 %v1060
          %1147 = vmatprep.subr.mxu0 0.0
          %1148 = vmatpush1.msra.mxu0 %v1061
          %1149 = vmatprep.subr.mxu0 0.0
          %1150 = vmatpush1.msra.mxu0 %v1062
          %1151 = vmatprep.subr.mxu0 0.0
          %1152 = vmatpush1.msra.mxu0 %v1063
          %1153 = vmatprep.subr.mxu0 0.0
          %1154 = vmatpush1.msra.mxu0 %v1064
          %1155 = vmatprep.subr.mxu0 0.0
          %1156 = vmatpush1.msra.mxu0 %v1065
          %1157 = vmatprep.subr.mxu0 0.0
          %1158 = vmatpush1.msra.mxu0 %v1066
          %1159 = vmatprep.subr.mxu0 0.0
          %1160 = vmatpush1.msra.mxu0 %v1067
          %1161 = vmatprep.subr.mxu0 0.0
          %1162 = vmatpush1.msra.mxu0 %v1068
          %1163 = vmatprep.subr.mxu0 0.0
          %1164 = vmatpush1.msra.mxu0 %v1069
          %1165 = vmatprep.subr.mxu0 0.0
          %1166 = vmatpush1.msra.mxu0 %v1070
          %1167 = vmatprep.mubr.f32.mxu0 %v880
          %1168 = vmatmul.mubr.f32.gmra.mrb[0].mxu0 %v879
          %v1169 = vpop.f32.mrb[0].mxu0
          %v1170 = vadd.f32 0.0, %v1169
          %v1171 = vpop.f32.mrb[0].mxu0
          %1172 = vmatprep.mubr.f32.mxu0 %v884
          %1173 = vmatmul.mubr.f32.gmra.mrb[0].mxu0 %v883
          %v1174 = vpop.f32.mrb[0].mxu0
          %v1175 = vadd.f32 0.0, %v1174
          %v1176 = vpop.f32.mrb[0].mxu0
          %1177 = vmatprep.mubr.f32.mxu0 %v888
          %1178 = vmatmul.mubr.f32.gmra.mrb[0].mxu0 %v887
          %v1179 = vpop.f32.mrb[0].mxu0
          %v1180 = vadd.f32 0.0, %v1179
          %v1181 = vpop.f32.mrb[0].mxu0
          %1182 = vmatprep.mubr.f32.mxu0 %v892
          %1183 = vmatmul.mubr.f32.gmra.mrb[0].mxu0 %v891
          %v1184 = vpop.f32.mrb[0].mxu0
          %v1185 = vadd.f32 0.0, %v1184
          %v1186 = vpop.f32.mrb[0].mxu0
          %1187 = vmatprep.mubr.f32.mxu0 %v896
          %1188 = vmatmul.mubr.f32.gmra.mrb[0].mxu0 %v895
          %v1189 = vpop.f32.mrb[0].mxu0
          %v1190 = vadd.f32 0.0, %v1189
          %v1191 = vpop.f32.mrb[0].mxu0
          %1192 = vmatprep.mubr.f32.mxu0 %v900
          %1193 = vmatmul.mubr.f32.gmra.mrb[0].mxu0 %v899
          %v1194 = vpop.f32.mrb[0].mxu0
          %v1195 = vadd.f32 0.0, %v1194
          %v1196 = vpop.f32.mrb[0].mxu0
          %1197 = vmatprep.mubr.f32.mxu0 %v904
          %1198 = vmatmul.mubr.f32.gmra.mrb[0].mxu0 %v903
          %v1199 = vpop.f32.mrb[0].mxu0
          %v1200 = vadd.f32 0.0, %v1199
          %v1201 = vpop.f32.mrb[0].mxu0
          %1202 = vmatprep.mubr.f32.mxu0 %v908
          %1203 = vmatmul.mubr.f32.gmra.mrb[0].mxu0 %v907
          %v1204 = vpop.f32.mrb[0].mxu0
          %v1205 = vadd.f32 0.0, %v1204
          %v1206 = vpop.f32.mrb[0].mxu0
          %1207 = vmatprep.mubr.f32.mxu0 %v912
          %1208 = vmatmul.mubr.f32.gmra.mrb[0].mxu0 %v911
          %v1209 = vpop.f32.mrb[0].mxu0
          %v1210 = vadd.f32 0.0, %v1209
          %v1211 = vpop.f32.mrb[0].mxu0
          %1212 = vmatprep.mubr.f32.mxu0 %v916
          %1213 = vmatmul.mubr.f32.gmra.mrb[0].mxu0 %v915
          %v1214 = vpop.f32.mrb[0].mxu0
          %v1215 = vadd.f32 0.0, %v1214
          %v1216 = vpop.f32.mrb[0].mxu0
          %1217 = vmatprep.mubr.f32.mxu0 %v920
          %1218 = vmatmul.mubr.f32.gmra.mrb[0].mxu0 %v919
          %v1219 = vpop.f32.mrb[0].mxu0
          %v1220 = vadd.f32 0.0, %v1219
          %v1221 = vpop.f32.mrb[0].mxu0
          %1222 = vmatprep.mubr.f32.mxu0 %v924
          %1223 = vmatmul.mubr.f32.gmra.mrb[0].mxu0 %v923
          %v1224 = vpop.f32.mrb[0].mxu0
          %v1225 = vadd.f32 0.0, %v1224
          %v1226 = vpop.f32.mrb[0].mxu0
          %1227 = vmatprep.mubr.f32.mxu0 %v928
          %1228 = vmatmul.mubr.f32.gmra.mrb[0].mxu0 %v927
          %v1229 = vpop.f32.mrb[0].mxu0
          %v1230 = vadd.f32 0.0, %v1229
          %v1231 = vpop.f32.mrb[0].mxu0
          %1232 = vmatprep.mubr.f32.mxu0 %v932
          %1233 = vmatmul.mubr.f32.gmra.mrb[0].mxu0 %v931
          %v1234 = vpop.f32.mrb[0].mxu0
          %v1235 = vadd.f32 0.0, %v1234
          %v1236 = vpop.f32.mrb[0].mxu0
          %1237 = vmatprep.mubr.f32.mxu0 %v936
          %1238 = vmatmul.mubr.f32.gmra.mrb[0].mxu0 %v935
          %v1239 = vpop.f32.mrb[0].mxu0
          %v1240 = vadd.f32 0.0, %v1239
          %v1241 = vpop.f32.mrb[0].mxu0
          %1242 = vmatprep.mubr.f32.mxu0 %v940
          %1243 = vmatmul.mubr.f32.gmra.mrb[0].mxu0 %v939
          %v1244 = vpop.f32.mrb[0].mxu0
          %v1245 = vadd.f32 0.0, %v1244
          %v1246 = vpop.f32.mrb[0].mxu0
          %1247 = vmatprep.mubr.f32.mxu0 %v944
          %1248 = vmatmul.mubr.f32.gmra.mrb[0].mxu0 %v943
          %v1249 = vpop.f32.mrb[0].mxu0
          %v1250 = vadd.f32 0.0, %v1249
          %v1251 = vpop.f32.mrb[0].mxu0
          %1252 = vmatprep.mubr.f32.mxu0 %v948
          %1253 = vmatmul.mubr.f32.gmra.mrb[0].mxu0 %v947
          %v1254 = vpop.f32.mrb[0].mxu0
          %v1255 = vadd.f32 0.0, %v1254
          %v1256 = vpop.f32.mrb[0].mxu0
          %1257 = vmatprep.mubr.f32.mxu0 %v952
          %1258 = vmatmul.mubr.f32.gmra.mrb[0].mxu0 %v951
          %v1259 = vpop.f32.mrb[0].mxu0
          %v1260 = vadd.f32 0.0, %v1259
          %v1261 = vpop.f32.mrb[0].mxu0
          %1262 = vmatprep.mubr.f32.mxu0 %v956
          %1263 = vmatmul.mubr.f32.gmra.mrb[0].mxu0 %v955
          %v1264 = vpop.f32.mrb[0].mxu0
          %v1265 = vadd.f32 0.0, %v1264
          %v1266 = vpop.f32.mrb[0].mxu0
          %1267 = vmatprep.mubr.f32.mxu0 %v960
          %1268 = vmatmul.mubr.f32.gmra.mrb[0].mxu0 %v959
          %v1269 = vpop.f32.mrb[0].mxu0
          %v1270 = vadd.f32 0.0, %v1269
          %v1271 = vpop.f32.mrb[0].mxu0
          %1272 = vmatprep.mubr.f32.mxu0 %v964
          %1273 = vmatmul.mubr.f32.gmra.mrb[0].mxu0 %v963
          %v1274 = vpop.f32.mrb[0].mxu0
          %v1275 = vadd.f32 0.0, %v1274
          %v1276 = vpop.f32.mrb[0].mxu0
          %1277 = vmatprep.mubr.f32.mxu0 %v968
          %1278 = vmatmul.mubr.f32.gmra.mrb[0].mxu0 %v967
          %v1279 = vpop.f32.mrb[0].mxu0
          %v1280 = vadd.f32 0.0, %v1279
          %v1281 = vpop.f32.mrb[0].mxu0
          %1282 = vmatprep.mubr.f32.mxu0 %v972
          %1283 = vmatmul.mubr.f32.gmra.mrb[0].mxu0 %v971
          %v1284 = vpop.f32.mrb[0].mxu0
          %v1285 = vadd.f32 0.0, %v1284
          %v1286 = vpop.f32.mrb[0].mxu0
          %1287 = vmatprep.mubr.f32.mxu0 %v976
          %1288 = vmatmul.mubr.f32.gmra.mrb[0].mxu0 %v975
          %v1289 = vpop.f32.mrb[0].mxu0
          %v1290 = vadd.f32 0.0, %v1289
          %v1291 = vpop.f32.mrb[0].mxu0
          %1292 = vmatprep.mubr.f32.mxu0 %v980
          %1293 = vmatmul.mubr.f32.gmra.mrb[0].mxu0 %v979
          %v1294 = vpop.f32.mrb[0].mxu0
          %v1295 = vadd.f32 0.0, %v1294
          %v1296 = vpop.f32.mrb[0].mxu0
          %1297 = vmatprep.mubr.f32.mxu0 %v984
          %1298 = vmatmul.mubr.f32.gmra.mrb[0].mxu0 %v983
          %v1299 = vpop.f32.mrb[0].mxu0
          %v1300 = vadd.f32 0.0, %v1299
          %v1301 = vpop.f32.mrb[0].mxu0
          %1302 = vmatprep.mubr.f32.mxu0 %v988
          %1303 = vmatmul.mubr.f32.gmra.mrb[0].mxu0 %v987
          %v1304 = vpop.f32.mrb[0].mxu0
          %v1305 = vadd.f32 0.0, %v1304
          %v1306 = vpop.f32.mrb[0].mxu0
          %1307 = vmatprep.mubr.f32.mxu0 %v992
          %1308 = vmatmul.mubr.f32.gmra.mrb[0].mxu0 %v991
          %v1309 = vpop.f32.mrb[0].mxu0
          %v1310 = vadd.f32 0.0, %v1309
          %v1311 = vpop.f32.mrb[0].mxu0
          %1312 = vmatprep.mubr.f32.mxu0 %v996
          %1313 = vmatmul.mubr.f32.gmra.mrb[0].mxu0 %v995
          %v1314 = vpop.f32.mrb[0].mxu0
          %v1315 = vadd.f32 0.0, %v1314
          %v1316 = vpop.f32.mrb[0].mxu0
          %1317 = vmatprep.mubr.f32.mxu0 %v1000
          %1318 = vmatmul.mubr.f32.gmra.mrb[0].mxu0 %v999
          %v1319 = vpop.f32.mrb[0].mxu0
          %v1320 = vadd.f32 0.0, %v1319
          %v1321 = vpop.f32.mrb[0].mxu0
          %1322 = vmatprep.mubr.f32.mxu0 %v1004
          %1323 = vmatmul.mubr.f32.gmra.mrb[0].mxu0 %v1003
          %v1324 = vpop.f32.mrb[0].mxu0
          %v1325 = vadd.f32 0.0, %v1324
          %v1326 = vpop.f32.mrb[0].mxu0
          %1327 = vdwg.mxu0
          %1328 = vmatprep.subr.mxu0 0.0
          %1329 = vmatpush1.msra.mxu0 %v1071
          %1330 = vmatprep.subr.mxu0 0.0
          %1331 = vmatpush1.msra.mxu0 %v1072
          %1332 = vmatprep.subr.mxu0 0.0
          %1333 = vmatpush1.msra.mxu0 %v1073
          %1334 = vmatprep.subr.mxu0 0.0
          %1335 = vmatpush1.msra.mxu0 %v1074
          %1336 = vmatprep.subr.mxu0 0.0
          %1337 = vmatpush1.msra.mxu0 %v1075
          %1338 = vmatprep.subr.mxu0 0.0
          %1339 = vmatpush1.msra.mxu0 %v1076
          %1340 = vmatprep.subr.mxu0 0.0
          %1341 = vmatpush1.msra.mxu0 %v1077
          %1342 = vmatprep.subr.mxu0 0.0
          %1343 = vmatpush1.msra.mxu0 %v1078
          %1344 = vmatprep.subr.mxu0 0.0
          %1345 = vmatpush1.msra.mxu0 %v1079
          %1346 = vmatprep.subr.mxu0 0.0
          %1347 = vmatpush1.msra.mxu0 %v1080
          %1348 = vmatprep.subr.mxu0 0.0
          %1349 = vmatpush1.msra.mxu0 %v1081
          %1350 = vmatprep.subr.mxu0 0.0
          %1351 = vmatpush1.msra.mxu0 %v1082
          %1352 = vmatprep.subr.mxu0 0.0
          %1353 = vmatpush1.msra.mxu0 %v1083
          %1354 = vmatprep.subr.mxu0 0.0
          %1355 = vmatpush1.msra.mxu0 %v1084
          %1356 = vmatprep.subr.mxu0 0.0
          %1357 = vmatpush1.msra.mxu0 %v1085
          %1358 = vmatprep.subr.mxu0 0.0
          %1359 = vmatpush1.msra.mxu0 %v1086
          %1360 = vmatprep.subr.mxu0 0.0
          %1361 = vmatpush1.msra.mxu0 %v1087
          %1362 = vmatprep.subr.mxu0 0.0
          %1363 = vmatpush1.msra.mxu0 %v1088
          %1364 = vmatprep.subr.mxu0 0.0
          %1365 = vmatpush1.msra.mxu0 %v1089
          %1366 = vmatprep.subr.mxu0 0.0
          %1367 = vmatpush1.msra.mxu0 %v1090
          %1368 = vmatprep.subr.mxu0 0.0
          %1369 = vmatpush1.msra.mxu0 %v1091
          %1370 = vmatprep.subr.mxu0 0.0
          %1371 = vmatpush1.msra.mxu0 %v1092
          %1372 = vmatprep.subr.mxu0 0.0
          %1373 = vmatpush1.msra.mxu0 %v1093
          %1374 = vmatprep.subr.mxu0 0.0
          %1375 = vmatpush1.msra.mxu0 %v1094
          %1376 = vmatprep.subr.mxu0 0.0
          %1377 = vmatpush1.msra.mxu0 %v1095
          %1378 = vmatprep.subr.mxu0 0.0
          %1379 = vmatpush1.msra.mxu0 %v1096
          %1380 = vmatprep.subr.mxu0 0.0
          %1381 = vmatpush1.msra.mxu0 %v1097
          %1382 = vmatprep.subr.mxu0 0.0
          %1383 = vmatpush1.msra.mxu0 %v1098
          %1384 = vmatprep.subr.mxu0 0.0
          %1385 = vmatpush1.msra.mxu0 %v1099
          %1386 = vmatprep.subr.mxu0 0.0
          %1387 = vmatpush1.msra.mxu0 %v1100
          %1388 = vmatprep.subr.mxu0 0.0
          %1389 = vmatpush1.msra.mxu0 %v1101
          %1390 = vmatprep.subr.mxu0 0.0
          %1391 = vmatpush1.msra.mxu0 %v1102
          %1392 = vmatprep.mubr.f32.mxu0 %v882
          %1393 = vmatmul.mubr.f32.gmra.mrb[0].mxu0 %v881
          %v1394 = vpop.f32.mrb[0].mxu0
          %v1395 = vadd.f32 %v1170, %v1394
          %v1396 = vpop.f32.mrb[0].mxu0
          %1397 = vmatprep.mubr.f32.mxu0 %v886
          %1398 = vmatmul.mubr.f32.gmra.mrb[0].mxu0 %v885
          %v1399 = vpop.f32.mrb[0].mxu0
          %v1400 = vadd.f32 %v1175, %v1399
          %v1401 = vpop.f32.mrb[0].mxu0
          %1402 = vmatprep.mubr.f32.mxu0 %v890
          %1403 = vmatmul.mubr.f32.gmra.mrb[0].mxu0 %v889
          %v1404 = vpop.f32.mrb[0].mxu0
          %v1405 = vadd.f32 %v1180, %v1404
          %v1406 = vpop.f32.mrb[0].mxu0
          %1407 = vmatprep.mubr.f32.mxu0 %v894
          %1408 = vmatmul.mubr.f32.gmra.mrb[0].mxu0 %v893
          %v1409 = vpop.f32.mrb[0].mxu0
          %v1410 = vadd.f32 %v1185, %v1409
          %v1411 = vpop.f32.mrb[0].mxu0
          %1412 = vmatprep.mubr.f32.mxu0 %v898
          %1413 = vmatmul.mubr.f32.gmra.mrb[0].mxu0 %v897
          %v1414 = vpop.f32.mrb[0].mxu0
          %v1415 = vadd.f32 %v1190, %v1414
          %v1416 = vpop.f32.mrb[0].mxu0
          %1417 = vmatprep.mubr.f32.mxu0 %v902
          %1418 = vmatmul.mubr.f32.gmra.mrb[0].mxu0 %v901
          %v1419 = vpop.f32.mrb[0].mxu0
          %v1420 = vadd.f32 %v1195, %v1419
          %v1421 = vpop.f32.mrb[0].mxu0
          %1422 = vmatprep.mubr.f32.mxu0 %v906
          %1423 = vmatmul.mubr.f32.gmra.mrb[0].mxu0 %v905
          %v1424 = vpop.f32.mrb[0].mxu0
          %v1425 = vadd.f32 %v1200, %v1424
          %v1426 = vpop.f32.mrb[0].mxu0
          %1427 = vmatprep.mubr.f32.mxu0 %v910
          %1428 = vmatmul.mubr.f32.gmra.mrb[0].mxu0 %v909
          %v1429 = vpop.f32.mrb[0].mxu0
          %v1430 = vadd.f32 %v1205, %v1429
          %v1431 = vpop.f32.mrb[0].mxu0
          %1432 = vmatprep.mubr.f32.mxu0 %v914
          %1433 = vmatmul.mubr.f32.gmra.mrb[0].mxu0 %v913
          %v1434 = vpop.f32.mrb[0].mxu0
          %v1435 = vadd.f32 %v1210, %v1434
          %v1436 = vpop.f32.mrb[0].mxu0
          %1437 = vmatprep.mubr.f32.mxu0 %v918
          %1438 = vmatmul.mubr.f32.gmra.mrb[0].mxu0 %v917
          %v1439 = vpop.f32.mrb[0].mxu0
          %v1440 = vadd.f32 %v1215, %v1439
          %v1441 = vpop.f32.mrb[0].mxu0
          %1442 = vmatprep.mubr.f32.mxu0 %v922
          %1443 = vmatmul.mubr.f32.gmra.mrb[0].mxu0 %v921
          %v1444 = vpop.f32.mrb[0].mxu0
          %v1445 = vadd.f32 %v1220, %v1444
          %v1446 = vpop.f32.mrb[0].mxu0
          %1447 = vmatprep.mubr.f32.mxu0 %v926
          %1448 = vmatmul.mubr.f32.gmra.mrb[0].mxu0 %v925
          %v1449 = vpop.f32.mrb[0].mxu0
          %v1450 = vadd.f32 %v1225, %v1449
          %v1451 = vpop.f32.mrb[0].mxu0
          %1452 = vmatprep.mubr.f32.mxu0 %v930
          %1453 = vmatmul.mubr.f32.gmra.mrb[0].mxu0 %v929
          %v1454 = vpop.f32.mrb[0].mxu0
          %v1455 = vadd.f32 %v1230, %v1454
          %v1456 = vpop.f32.mrb[0].mxu0
          %1457 = vmatprep.mubr.f32.mxu0 %v934
          %1458 = vmatmul.mubr.f32.gmra.mrb[0].mxu0 %v933
          %v1459 = vpop.f32.mrb[0].mxu0
          %v1460 = vadd.f32 %v1235, %v1459
          %v1461 = vpop.f32.mrb[0].mxu0
          %1462 = vmatprep.mubr.f32.mxu0 %v938
          %1463 = vmatmul.mubr.f32.gmra.mrb[0].mxu0 %v937
          %v1464 = vpop.f32.mrb[0].mxu0
          %v1465 = vadd.f32 %v1240, %v1464
          %v1466 = vpop.f32.mrb[0].mxu0
          %1467 = vmatprep.mubr.f32.mxu0 %v942
          %1468 = vmatmul.mubr.f32.gmra.mrb[0].mxu0 %v941
          %v1469 = vpop.f32.mrb[0].mxu0
          %v1470 = vadd.f32 %v1245, %v1469
          %v1471 = vpop.f32.mrb[0].mxu0
          %1472 = vmatprep.mubr.f32.mxu0 %v946
          %1473 = vmatmul.mubr.f32.gmra.mrb[0].mxu0 %v945
          %v1474 = vpop.f32.mrb[0].mxu0
          %v1475 = vadd.f32 %v1250, %v1474
          %v1476 = vpop.f32.mrb[0].mxu0
          %1477 = vmatprep.mubr.f32.mxu0 %v950
          %1478 = vmatmul.mubr.f32.gmra.mrb[0].mxu0 %v949
          %v1479 = vpop.f32.mrb[0].mxu0
          %v1480 = vadd.f32 %v1255, %v1479
          %v1481 = vpop.f32.mrb[0].mxu0
          %1482 = vmatprep.mubr.f32.mxu0 %v954
          %1483 = vmatmul.mubr.f32.gmra.mrb[0].mxu0 %v953
          %v1484 = vpop.f32.mrb[0].mxu0
          %v1485 = vadd.f32 %v1260, %v1484
          %v1486 = vpop.f32.mrb[0].mxu0
          %1487 = vmatprep.mubr.f32.mxu0 %v958
          %1488 = vmatmul.mubr.f32.gmra.mrb[0].mxu0 %v957
          %v1489 = vpop.f32.mrb[0].mxu0
          %v1490 = vadd.f32 %v1265, %v1489
          %v1491 = vpop.f32.mrb[0].mxu0
          %1492 = vmatprep.mubr.f32.mxu0 %v962
          %1493 = vmatmul.mubr.f32.gmra.mrb[0].mxu0 %v961
          %v1494 = vpop.f32.mrb[0].mxu0
          %v1495 = vadd.f32 %v1270, %v1494
          %v1496 = vpop.f32.mrb[0].mxu0
          %1497 = vmatprep.mubr.f32.mxu0 %v966
          %1498 = vmatmul.mubr.f32.gmra.mrb[0].mxu0 %v965
          %v1499 = vpop.f32.mrb[0].mxu0
          %v1500 = vadd.f32 %v1275, %v1499
          %v1501 = vpop.f32.mrb[0].mxu0
          %1502 = vmatprep.mubr.f32.mxu0 %v970
          %1503 = vmatmul.mubr.f32.gmra.mrb[0].mxu0 %v969
          %v1504 = vpop.f32.mrb[0].mxu0
          %v1505 = vadd.f32 %v1280, %v1504
          %v1506 = vpop.f32.mrb[0].mxu0
          %1507 = vmatprep.mubr.f32.mxu0 %v974
          %1508 = vmatmul.mubr.f32.gmra.mrb[0].mxu0 %v973
          %v1509 = vpop.f32.mrb[0].mxu0
          %v1510 = vadd.f32 %v1285, %v1509
          %v1511 = vpop.f32.mrb[0].mxu0
          %1512 = vmatprep.mubr.f32.mxu0 %v978
          %1513 = vmatmul.mubr.f32.gmra.mrb[0].mxu0 %v977
          %v1514 = vpop.f32.mrb[0].mxu0
          %v1515 = vadd.f32 %v1290, %v1514
          %v1516 = vpop.f32.mrb[0].mxu0
          %1517 = vmatprep.mubr.f32.mxu0 %v982
          %1518 = vmatmul.mubr.f32.gmra.mrb[0].mxu0 %v981
          %v1519 = vpop.f32.mrb[0].mxu0
          %v1520 = vadd.f32 %v1295, %v1519
          %v1521 = vpop.f32.mrb[0].mxu0
          %1522 = vmatprep.mubr.f32.mxu0 %v986
          %1523 = vmatmul.mubr.f32.gmra.mrb[0].mxu0 %v985
          %v1524 = vpop.f32.mrb[0].mxu0
          %v1525 = vadd.f32 %v1300, %v1524
          %v1526 = vpop.f32.mrb[0].mxu0
          %1527 = vmatprep.mubr.f32.mxu0 %v990
          %1528 = vmatmul.mubr.f32.gmra.mrb[0].mxu0 %v989
          %v1529 = vpop.f32.mrb[0].mxu0
          %v1530 = vadd.f32 %v1305, %v1529
          %v1531 = vpop.f32.mrb[0].mxu0
          %1532 = vmatprep.mubr.f32.mxu0 %v994
          %1533 = vmatmul.mubr.f32.gmra.mrb[0].mxu0 %v993
          %v1534 = vpop.f32.mrb[0].mxu0
          %v1535 = vadd.f32 %v1310, %v1534
          %v1536 = vpop.f32.mrb[0].mxu0
          %1537 = vmatprep.mubr.f32.mxu0 %v998
          %1538 = vmatmul.mubr.f32.gmra.mrb[0].mxu0 %v997
          %v1539 = vpop.f32.mrb[0].mxu0
          %v1540 = vadd.f32 %v1315, %v1539
          %v1541 = vpop.f32.mrb[0].mxu0
          %1542 = vmatprep.mubr.f32.mxu0 %v1002
          %1543 = vmatmul.mubr.f32.gmra.mrb[0].mxu0 %v1001
          %v1544 = vpop.f32.mrb[0].mxu0
          %v1545 = vadd.f32 %v1320, %v1544
          %v1546 = vpop.f32.mrb[0].mxu0
          %1547 = vmatprep.mubr.f32.mxu0 %v1006
          %1548 = vmatmul.mubr.f32.gmra.mrb[0].mxu0 %v1005
          %v1549 = vpop.f32.mrb[0].mxu0
          %v1550 = vadd.f32 %v1325, %v1549
          %v1551 = vpop.f32.mrb[0].mxu0
          %1552 = vdwg.mxu0
          %v1553 = vadd.f32 %v1007, %v1395
          %v1554 = vadd.f32 %v1008, %v1400
          %v1555 = vadd.f32 %v1009, %v1405
          %v1556 = vadd.f32 %v1010, %v1410
          %v1557 = vadd.f32 %v1011, %v1415
          %v1558 = vadd.f32 %v1012, %v1420
          %v1559 = vadd.f32 %v1013, %v1425
          %v1560 = vadd.f32 %v1014, %v1430
          %v1561 = vadd.f32 %v1015, %v1435
          %v1562 = vadd.f32 %v1016, %v1440
          %v1563 = vadd.f32 %v1017, %v1445
          %v1564 = vadd.f32 %v1018, %v1450
          %v1565 = vadd.f32 %v1019, %v1455
          %v1566 = vadd.f32 %v1020, %v1460
          %v1567 = vadd.f32 %v1021, %v1465
          %v1568 = vadd.f32 %v1022, %v1470
          %v1569 = vadd.f32 %v1023, %v1475
          %v1570 = vadd.f32 %v1024, %v1480
          %v1571 = vadd.f32 %v1025, %v1485
          %v1572 = vadd.f32 %v1026, %v1490
          %v1573 = vadd.f32 %v1027, %v1495
          %v1574 = vadd.f32 %v1028, %v1500
          %v1575 = vadd.f32 %v1029, %v1505
          %v1576 = vadd.f32 %v1030, %v1510
          %v1577 = vadd.f32 %v1031, %v1515
          %v1578 = vadd.f32 %v1032, %v1520
          %v1579 = vadd.f32 %v1033, %v1525
          %v1580 = vadd.f32 %v1034, %v1530
          %v1581 = vadd.f32 %v1035, %v1535
          %v1582 = vadd.f32 %v1036, %v1540
          %v1583 = vadd.f32 %v1037, %v1545
          %v1584 = vadd.f32 %v1038, %v1550
          %1585 = vst [vmem:[#allocation2] sm:$0xff] %v1553
          %1586 = vst [vmem:[#allocation2 + $0x8] sm:$0xff] %v1554
          %1587 = vst [vmem:[#allocation2 + $0x10] sm:$0xff] %v1555
          %1588 = vst [vmem:[#allocation2 + $0x18] sm:$0xff] %v1556
          %1589 = vst [vmem:[#allocation2 + $0x20] sm:$0xff] %v1557
          %1590 = vst [vmem:[#allocation2 + $0x28] sm:$0xff] %v1558
          %1591 = vst [vmem:[#allocation2 + $0x30] sm:$0xff] %v1559
          %1592 = vst [vmem:[#allocation2 + $0x38] sm:$0xff] %v1560
          %1593 = vst [vmem:[#allocation2 + $0x40] sm:$0xff] %v1561
          %1594 = vst [vmem:[#allocation2 + $0x48] sm:$0xff] %v1562
          %1595 = vst [vmem:[#allocation2 + $0x50] sm:$0xff] %v1563
          %1596 = vst [vmem:[#allocation2 + $0x58] sm:$0xff] %v1564
          %1597 = vst [vmem:[#allocation2 + $0x60] sm:$0xff] %v1565
          %1598 = vst [vmem:[#allocation2 + $0x68] sm:$0xff] %v1566
          %1599 = vst [vmem:[#allocation2 + $0x70] sm:$0xff] %v1567
          %1600 = vst [vmem:[#allocation2 + $0x78] sm:$0xff] %v1568
          %1601 = vst [vmem:[#allocation2 + $0x80] sm:$0xff] %v1569
          %1602 = vst [vmem:[#allocation2 + $0x88] sm:$0xff] %v1570
          %1603 = vst [vmem:[#allocation2 + $0x90] sm:$0xff] %v1571
          %1604 = vst [vmem:[#allocation2 + $0x98] sm:$0xff] %v1572
          %1605 = vst [vmem:[#allocation2 + $0xa0] sm:$0xff] %v1573
          %1606 = vst [vmem:[#allocation2 + $0xa8] sm:$0xff] %v1574
          %1607 = vst [vmem:[#allocation2 + $0xb0] sm:$0xff] %v1575
          %1608 = vst [vmem:[#allocation2 + $0xb8] sm:$0xff] %v1576
          %1609 = vst [vmem:[#allocation2 + $0xc0] sm:$0xff] %v1577
          %1610 = vst [vmem:[#allocation2 + $0xc8] sm:$0xff] %v1578
          %1611 = vst [vmem:[#allocation2 + $0xd0] sm:$0xff] %v1579
          %1612 = vst [vmem:[#allocation2 + $0xd8] sm:$0xff] %v1580
          %1613 = vst [vmem:[#allocation2 + $0xe0] sm:$0xff] %v1581
          %1614 = vst [vmem:[#allocation2 + $0xe8] sm:$0xff] %v1582
          %1615 = vst [vmem:[#allocation2 + $0xf0] sm:$0xff] %v1583
          %1616 = vst [vmem:[#allocation2 + $0xf8] sm:$0xff] %v1584
        $region84: #{tpu_custom_call.1} parent=47 // pred_fallthru
          _
        %s1617 = ssub.s32 %s498, 1
        %p1618 = scmp.eq.s32.totalorder %s42, %s1617
        // Predicated region
        $region85: #{tpu_custom_call.1} parent=47 // pred_check
          %p1619 = pneg %p1618
        $region86: #{tpu_custom_call.1} parent=47 // pred_check_branch
          %1621 = sbr.rel (%p1619) target = $region88
        $region87: #{tpu_custom_call.1} parent=47 // pred_region
          %v1622 = vld [vmem:[#allocation2] sm:$0xff]
          %v1623 = vld [vmem:[#allocation2 + $0x8] sm:$0xff]
          %v1624 = vld [vmem:[#allocation2 + $0x10] sm:$0xff]
          %v1625 = vld [vmem:[#allocation2 + $0x18] sm:$0xff]
          %v1626 = vld [vmem:[#allocation2 + $0x20] sm:$0xff]
          %v1627 = vld [vmem:[#allocation2 + $0x28] sm:$0xff]
          %v1628 = vld [vmem:[#allocation2 + $0x30] sm:$0xff]
          %v1629 = vld [vmem:[#allocation2 + $0x38] sm:$0xff]
          %v1630 = vld [vmem:[#allocation2 + $0x40] sm:$0xff]
          %v1631 = vld [vmem:[#allocation2 + $0x48] sm:$0xff]
          %v1632 = vld [vmem:[#allocation2 + $0x50] sm:$0xff]
          %v1633 = vld [vmem:[#allocation2 + $0x58] sm:$0xff]
          %v1634 = vld [vmem:[#allocation2 + $0x60] sm:$0xff]
          %v1635 = vld [vmem:[#allocation2 + $0x68] sm:$0xff]
          %v1636 = vld [vmem:[#allocation2 + $0x70] sm:$0xff]
          %v1637 = vld [vmem:[#allocation2 + $0x78] sm:$0xff]
          %v1638 = vld [vmem:[#allocation2 + $0x80] sm:$0xff]
          %v1639 = vld [vmem:[#allocation2 + $0x88] sm:$0xff]
          %v1640 = vld [vmem:[#allocation2 + $0x90] sm:$0xff]
          %v1641 = vld [vmem:[#allocation2 + $0x98] sm:$0xff]
          %v1642 = vld [vmem:[#allocation2 + $0xa0] sm:$0xff]
          %v1643 = vld [vmem:[#allocation2 + $0xa8] sm:$0xff]
          %v1644 = vld [vmem:[#allocation2 + $0xb0] sm:$0xff]
          %v1645 = vld [vmem:[#allocation2 + $0xb8] sm:$0xff]
          %v1646 = vld [vmem:[#allocation2 + $0xc0] sm:$0xff]
          %v1647 = vld [vmem:[#allocation2 + $0xc8] sm:$0xff]
          %v1648 = vld [vmem:[#allocation2 + $0xd0] sm:$0xff]
          %v1649 = vld [vmem:[#allocation2 + $0xd8] sm:$0xff]
          %v1650 = vld [vmem:[#allocation2 + $0xe0] sm:$0xff]
          %v1651 = vld [vmem:[#allocation2 + $0xe8] sm:$0xff]
          %v1652 = vld [vmem:[#allocation2 + $0xf0] sm:$0xff]
          %v1653 = vld [vmem:[#allocation2 + $0xf8] sm:$0xff]
          %v1654 = vld [vmem:[%s425] sm:$0xff]
          %v1655 = vld [vmem:[%s425 + $0x8] sm:$0xff]
          %v1656 = vld [vmem:[%s425 + $0x10] sm:$0xff]
          %v1657 = vld [vmem:[%s425 + $0x18] sm:$0xff]
          %v1658 = vld [vmem:[%s425 + $0x20] sm:$0xff]
          %v1659 = vld [vmem:[%s425 + $0x28] sm:$0xff]
          %v1660 = vld [vmem:[%s425 + $0x30] sm:$0xff]
          %v1661 = vld [vmem:[%s425 + $0x38] sm:$0xff]
          %v1662 = vld [vmem:[%s425 + $0x40] sm:$0xff]
          %v1663 = vld [vmem:[%s425 + $0x48] sm:$0xff]
          %v1664 = vld [vmem:[%s425 + $0x50] sm:$0xff]
          %v1665 = vld [vmem:[%s425 + $0x58] sm:$0xff]
          %v1666 = vld [vmem:[%s425 + $0x60] sm:$0xff]
          %v1667 = vld [vmem:[%s425 + $0x68] sm:$0xff]
          %v1668 = vld [vmem:[%s425 + $0x70] sm:$0xff]
          %v1669 = vld [vmem:[%s425 + $0x78] sm:$0xff]
          %v1670 = vld [vmem:[%s425 + $0x80] sm:$0xff]
          %v1671 = vld [vmem:[%s425 + $0x88] sm:$0xff]
          %v1672 = vld [vmem:[%s425 + $0x90] sm:$0xff]
          %v1673 = vld [vmem:[%s425 + $0x98] sm:$0xff]
          %v1674 = vld [vmem:[%s425 + $0xa0] sm:$0xff]
          %v1675 = vld [vmem:[%s425 + $0xa8] sm:$0xff]
          %v1676 = vld [vmem:[%s425 + $0xb0] sm:$0xff]
          %v1677 = vld [vmem:[%s425 + $0xb8] sm:$0xff]
          %v1678 = vld [vmem:[%s425 + $0xc0] sm:$0xff]
          %v1679 = vld [vmem:[%s425 + $0xc8] sm:$0xff]
          %v1680 = vld [vmem:[%s425 + $0xd0] sm:$0xff]
          %v1681 = vld [vmem:[%s425 + $0xd8] sm:$0xff]
          %v1682 = vld [vmem:[%s425 + $0xe0] sm:$0xff]
          %v1683 = vld [vmem:[%s425 + $0xe8] sm:$0xff]
          %v1684 = vld [vmem:[%s425 + $0xf0] sm:$0xff]
          %v1685 = vld [vmem:[%s425 + $0xf8] sm:$0xff]
          %v1686 = vadd.f32 %v1622, %v1654
          %v1687 = vadd.f32 %v1623, %v1655
          %v1688 = vadd.f32 %v1624, %v1656
          %v1689 = vadd.f32 %v1625, %v1657
          %v1690 = vadd.f32 %v1626, %v1658
          %v1691 = vadd.f32 %v1627, %v1659
          %v1692 = vadd.f32 %v1628, %v1660
          %v1693 = vadd.f32 %v1629, %v1661
          %v1694 = vadd.f32 %v1630, %v1662
          %v1695 = vadd.f32 %v1631, %v1663
          %v1696 = vadd.f32 %v1632, %v1664
          %v1697 = vadd.f32 %v1633, %v1665
          %v1698 = vadd.f32 %v1634, %v1666
          %v1699 = vadd.f32 %v1635, %v1667
          %v1700 = vadd.f32 %v1636, %v1668
          %v1701 = vadd.f32 %v1637, %v1669
          %v1702 = vadd.f32 %v1638, %v1670
          %v1703 = vadd.f32 %v1639, %v1671
          %v1704 = vadd.f32 %v1640, %v1672
          %v1705 = vadd.f32 %v1641, %v1673
          %v1706 = vadd.f32 %v1642, %v1674
          %v1707 = vadd.f32 %v1643, %v1675
          %v1708 = vadd.f32 %v1644, %v1676
          %v1709 = vadd.f32 %v1645, %v1677
          %v1710 = vadd.f32 %v1646, %v1678
          %v1711 = vadd.f32 %v1647, %v1679
          %v1712 = vadd.f32 %v1648, %v1680
          %v1713 = vadd.f32 %v1649, %v1681
          %v1714 = vadd.f32 %v1650, %v1682
          %v1715 = vadd.f32 %v1651, %v1683
          %v1716 = vadd.f32 %v1652, %v1684
          %v1717 = vadd.f32 %v1653, %v1685
          %v1718 = vld [vmem:[#allocation12] sm:$0xff]
          %v1719 = vld [vmem:[#allocation12 + $0x8] sm:$0xff]
          %v1720 = vld [vmem:[#allocation12 + $0x10] sm:$0xff]
          %v1721 = vld [vmem:[#allocation12 + $0x18] sm:$0xff]
          %v1722 = vld [vmem:[#allocation12 + $0x20] sm:$0xff]
          %v1723 = vld [vmem:[#allocation12 + $0x28] sm:$0xff]
          %v1724 = vld [vmem:[#allocation12 + $0x30] sm:$0xff]
          %v1725 = vld [vmem:[#allocation12 + $0x38] sm:$0xff]
          %v1726 = vld [vmem:[#allocation12 + $0x40] sm:$0xff]
          %v1727 = vld [vmem:[#allocation12 + $0x48] sm:$0xff]
          %v1728 = vld [vmem:[#allocation12 + $0x50] sm:$0xff]
          %v1729 = vld [vmem:[#allocation12 + $0x58] sm:$0xff]
          %v1730 = vld [vmem:[#allocation12 + $0x60] sm:$0xff]
          %v1731 = vld [vmem:[#allocation12 + $0x68] sm:$0xff]
          %v1732 = vld [vmem:[#allocation12 + $0x70] sm:$0xff]
          %v1733 = vld [vmem:[#allocation12 + $0x78] sm:$0xff]
          %v1734 = vld [vmem:[#allocation14] sm:$0x1]
          %v1736 = vlaneseq
          %v1737 = vshrl.u32 %v1736, 7
          %v1738 = vsub.s32 0, %v1737
          %v1739 = vrot.slane %v1734, %v1738
          %1741 = vmatprep.subr.mxu0 0.0
          %1742 = vmatpush1.msra.mxu0 %v1718
          %1743 = vmatprep.subr.mxu0 0.0
          %1744 = vmatpush1.msra.mxu0 %v1719
          %1745 = vmatprep.subr.mxu0 0.0
          %1746 = vmatpush1.msra.mxu0 %v1720
          %1747 = vmatprep.subr.mxu0 0.0
          %1748 = vmatpush1.msra.mxu0 %v1721
          %1749 = vmatprep.subr.mxu0 0.0
          %1750 = vmatpush1.msra.mxu0 %v1722
          %1751 = vmatprep.subr.mxu0 0.0
          %1752 = vmatpush1.msra.mxu0 %v1723
          %1753 = vmatprep.subr.mxu0 0.0
          %1754 = vmatpush1.msra.mxu0 %v1724
          %1755 = vmatprep.subr.mxu0 0.0
          %1756 = vmatpush1.msra.mxu0 %v1725
          %1757 = vmatprep.subr.mxu0 0.0
          %1758 = vmatpush1.msra.mxu0 %v1726
          %1759 = vmatprep.subr.mxu0 0.0
          %1760 = vmatpush1.msra.mxu0 %v1727
          %1761 = vmatprep.subr.mxu0 0.0
          %1762 = vmatpush1.msra.mxu0 %v1728
          %1763 = vmatprep.subr.mxu0 0.0
          %1764 = vmatpush1.msra.mxu0 %v1729
          %1765 = vmatprep.subr.mxu0 0.0
          %1766 = vmatpush1.msra.mxu0 %v1730
          %1767 = vmatprep.subr.mxu0 0.0
          %1768 = vmatpush1.msra.mxu0 %v1731
          %1769 = vmatprep.subr.mxu0 0.0
          %1770 = vmatpush1.msra.mxu0 %v1732
          %1771 = vmatprep.subr.mxu0 0.0
          %1772 = vmatpush1.msra.mxu0 %v1733
          %1773 = vmatprep.subr.mxu0 0.0
          %1774 = vmatpush1.msra.mxu0 0.0
          %1775 = vmatprep.subr.mxu0 0.0
          %1776 = vmatpush1.msra.mxu0 0.0
          %1777 = vmatprep.subr.mxu0 0.0
          %1778 = vmatpush1.msra.mxu0 0.0
          %1779 = vmatprep.subr.mxu0 0.0
          %1780 = vmatpush1.msra.mxu0 0.0
          %1781 = vmatprep.subr.mxu0 0.0
          %1782 = vmatpush1.msra.mxu0 0.0
          %1783 = vmatprep.subr.mxu0 0.0
          %1784 = vmatpush1.msra.mxu0 0.0
          %1785 = vmatprep.subr.mxu0 0.0
          %1786 = vmatpush1.msra.mxu0 0.0
          %1787 = vmatprep.subr.mxu0 0.0
          %1788 = vmatpush1.msra.mxu0 0.0
          %1789 = vmatprep.subr.mxu0 0.0
          %1790 = vmatpush1.msra.mxu0 0.0
          %1791 = vmatprep.subr.mxu0 0.0
          %1792 = vmatpush1.msra.mxu0 0.0
          %1793 = vmatprep.subr.mxu0 0.0
          %1794 = vmatpush1.msra.mxu0 0.0
          %1795 = vmatprep.subr.mxu0 0.0
          %1796 = vmatpush1.msra.mxu0 0.0
          %1797 = vmatprep.subr.mxu0 0.0
          %1798 = vmatpush1.msra.mxu0 0.0
          %1799 = vmatprep.subr.mxu0 0.0
          %1800 = vmatpush1.msra.mxu0 0.0
          %1801 = vmatprep.subr.mxu0 0.0
          %1802 = vmatpush1.msra.mxu0 0.0
          %1803 = vmatprep.subr.mxu0 0.0
          %1804 = vmatpush1.msra.mxu0 0.0
          %1805 = vmatprep.mubr.f32.mxu0 0.0
          %1806 = vmatmul.mubr.f32.gmra.mrb[0].mxu0 %v1686
          %v1807 = vpop.f32.mrb[0].mxu0
          %v1808 = vadd.f32 %v1739, %v1807
          %v1809 = vpop.f32.mrb[0].mxu0
          %1810 = vmatprep.mubr.f32.mxu0 0.0
          %1811 = vmatmul.mubr.f32.gmra.mrb[0].mxu0 %v1687
          %v1812 = vpop.f32.mrb[0].mxu0
          %v1813 = vadd.f32 %v1739, %v1812
          %v1814 = vpop.f32.mrb[0].mxu0
          %1815 = vmatprep.mubr.f32.mxu0 0.0
          %1816 = vmatmul.mubr.f32.gmra.mrb[0].mxu0 %v1688
          %v1817 = vpop.f32.mrb[0].mxu0
          %v1818 = vadd.f32 %v1739, %v1817
          %v1819 = vpop.f32.mrb[0].mxu0
          %1820 = vmatprep.mubr.f32.mxu0 0.0
          %1821 = vmatmul.mubr.f32.gmra.mrb[0].mxu0 %v1689
          %v1822 = vpop.f32.mrb[0].mxu0
          %v1823 = vadd.f32 %v1739, %v1822
          %v1824 = vpop.f32.mrb[0].mxu0
          %1825 = vmatprep.mubr.f32.mxu0 0.0
          %1826 = vmatmul.mubr.f32.gmra.mrb[0].mxu0 %v1690
          %v1827 = vpop.f32.mrb[0].mxu0
          %v1828 = vadd.f32 %v1739, %v1827
          %v1829 = vpop.f32.mrb[0].mxu0
          %1830 = vmatprep.mubr.f32.mxu0 0.0
          %1831 = vmatmul.mubr.f32.gmra.mrb[0].mxu0 %v1691
          %v1832 = vpop.f32.mrb[0].mxu0
          %v1833 = vadd.f32 %v1739, %v1832
          %v1834 = vpop.f32.mrb[0].mxu0
          %1835 = vmatprep.mubr.f32.mxu0 0.0
          %1836 = vmatmul.mubr.f32.gmra.mrb[0].mxu0 %v1692
          %v1837 = vpop.f32.mrb[0].mxu0
          %v1838 = vadd.f32 %v1739, %v1837
          %v1839 = vpop.f32.mrb[0].mxu0
          %1840 = vmatprep.mubr.f32.mxu0 0.0
          %1841 = vmatmul.mubr.f32.gmra.mrb[0].mxu0 %v1693
          %v1842 = vpop.f32.mrb[0].mxu0
          %v1843 = vadd.f32 %v1739, %v1842
          %v1844 = vpop.f32.mrb[0].mxu0
          %1845 = vmatprep.mubr.f32.mxu0 0.0
          %1846 = vmatmul.mubr.f32.gmra.mrb[0].mxu0 %v1694
          %v1847 = vpop.f32.mrb[0].mxu0
          %v1848 = vadd.f32 %v1739, %v1847
          %v1849 = vpop.f32.mrb[0].mxu0
          %1850 = vmatprep.mubr.f32.mxu0 0.0
          %1851 = vmatmul.mubr.f32.gmra.mrb[0].mxu0 %v1695
          %v1852 = vpop.f32.mrb[0].mxu0
          %v1853 = vadd.f32 %v1739, %v1852
          %v1854 = vpop.f32.mrb[0].mxu0
          %1855 = vmatprep.mubr.f32.mxu0 0.0
          %1856 = vmatmul.mubr.f32.gmra.mrb[0].mxu0 %v1696
          %v1857 = vpop.f32.mrb[0].mxu0
          %v1858 = vadd.f32 %v1739, %v1857
          %v1859 = vpop.f32.mrb[0].mxu0
          %1860 = vmatprep.mubr.f32.mxu0 0.0
          %1861 = vmatmul.mubr.f32.gmra.mrb[0].mxu0 %v1697
          %v1862 = vpop.f32.mrb[0].mxu0
          %v1863 = vadd.f32 %v1739, %v1862
          %v1864 = vpop.f32.mrb[0].mxu0
          %1865 = vmatprep.mubr.f32.mxu0 0.0
          %1866 = vmatmul.mubr.f32.gmra.mrb[0].mxu0 %v1698
          %v1867 = vpop.f32.mrb[0].mxu0
          %v1868 = vadd.f32 %v1739, %v1867
          %v1869 = vpop.f32.mrb[0].mxu0
          %1870 = vmatprep.mubr.f32.mxu0 0.0
          %1871 = vmatmul.mubr.f32.gmra.mrb[0].mxu0 %v1699
          %v1872 = vpop.f32.mrb[0].mxu0
          %v1873 = vadd.f32 %v1739, %v1872
          %v1874 = vpop.f32.mrb[0].mxu0
          %1875 = vmatprep.mubr.f32.mxu0 0.0
          %1876 = vmatmul.mubr.f32.gmra.mrb[0].mxu0 %v1700
          %v1877 = vpop.f32.mrb[0].mxu0
          %v1878 = vadd.f32 %v1739, %v1877
          %v1879 = vpop.f32.mrb[0].mxu0
          %1880 = vmatprep.mubr.f32.mxu0 0.0
          %1881 = vmatmul.mubr.f32.gmra.mrb[0].mxu0 %v1701
          %v1882 = vpop.f32.mrb[0].mxu0
          %v1883 = vadd.f32 %v1739, %v1882
          %v1884 = vpop.f32.mrb[0].mxu0
          %1885 = vmatprep.mubr.f32.mxu0 0.0
          %1886 = vmatmul.mubr.f32.gmra.mrb[0].mxu0 %v1702
          %v1887 = vpop.f32.mrb[0].mxu0
          %v1888 = vadd.f32 %v1739, %v1887
          %v1889 = vpop.f32.mrb[0].mxu0
          %1890 = vmatprep.mubr.f32.mxu0 0.0
          %1891 = vmatmul.mubr.f32.gmra.mrb[0].mxu0 %v1703
          %v1892 = vpop.f32.mrb[0].mxu0
          %v1893 = vadd.f32 %v1739, %v1892
          %v1894 = vpop.f32.mrb[0].mxu0
          %1895 = vmatprep.mubr.f32.mxu0 0.0
          %1896 = vmatmul.mubr.f32.gmra.mrb[0].mxu0 %v1704
          %v1897 = vpop.f32.mrb[0].mxu0
          %v1898 = vadd.f32 %v1739, %v1897
          %v1899 = vpop.f32.mrb[0].mxu0
          %1900 = vmatprep.mubr.f32.mxu0 0.0
          %1901 = vmatmul.mubr.f32.gmra.mrb[0].mxu0 %v1705
          %v1902 = vpop.f32.mrb[0].mxu0
          %v1903 = vadd.f32 %v1739, %v1902
          %v1904 = vpop.f32.mrb[0].mxu0
          %1905 = vmatprep.mubr.f32.mxu0 0.0
          %1906 = vmatmul.mubr.f32.gmra.mrb[0].mxu0 %v1706
          %v1907 = vpop.f32.mrb[0].mxu0
          %v1908 = vadd.f32 %v1739, %v1907
          %v1909 = vpop.f32.mrb[0].mxu0
          %1910 = vmatprep.mubr.f32.mxu0 0.0
          %1911 = vmatmul.mubr.f32.gmra.mrb[0].mxu0 %v1707
          %v1912 = vpop.f32.mrb[0].mxu0
          %v1913 = vadd.f32 %v1739, %v1912
          %v1914 = vpop.f32.mrb[0].mxu0
          %1915 = vmatprep.mubr.f32.mxu0 0.0
          %1916 = vmatmul.mubr.f32.gmra.mrb[0].mxu0 %v1708
          %v1917 = vpop.f32.mrb[0].mxu0
          %v1918 = vadd.f32 %v1739, %v1917
          %v1919 = vpop.f32.mrb[0].mxu0
          %1920 = vmatprep.mubr.f32.mxu0 0.0
          %1921 = vmatmul.mubr.f32.gmra.mrb[0].mxu0 %v1709
          %v1922 = vpop.f32.mrb[0].mxu0
          %v1923 = vadd.f32 %v1739, %v1922
          %v1924 = vpop.f32.mrb[0].mxu0
          %1925 = vmatprep.mubr.f32.mxu0 0.0
          %1926 = vmatmul.mubr.f32.gmra.mrb[0].mxu0 %v1710
          %v1927 = vpop.f32.mrb[0].mxu0
          %v1928 = vadd.f32 %v1739, %v1927
          %v1929 = vpop.f32.mrb[0].mxu0
          %1930 = vmatprep.mubr.f32.mxu0 0.0
          %1931 = vmatmul.mubr.f32.gmra.mrb[0].mxu0 %v1711
          %v1932 = vpop.f32.mrb[0].mxu0
          %v1933 = vadd.f32 %v1739, %v1932
          %v1934 = vpop.f32.mrb[0].mxu0
          %1935 = vmatprep.mubr.f32.mxu0 0.0
          %1936 = vmatmul.mubr.f32.gmra.mrb[0].mxu0 %v1712
          %v1937 = vpop.f32.mrb[0].mxu0
          %v1938 = vadd.f32 %v1739, %v1937
          %v1939 = vpop.f32.mrb[0].mxu0
          %1940 = vmatprep.mubr.f32.mxu0 0.0
          %1941 = vmatmul.mubr.f32.gmra.mrb[0].mxu0 %v1713
          %v1942 = vpop.f32.mrb[0].mxu0
          %v1943 = vadd.f32 %v1739, %v1942
          %v1944 = vpop.f32.mrb[0].mxu0
          %1945 = vmatprep.mubr.f32.mxu0 0.0
          %1946 = vmatmul.mubr.f32.gmra.mrb[0].mxu0 %v1714
          %v1947 = vpop.f32.mrb[0].mxu0
          %v1948 = vadd.f32 %v1739, %v1947
          %v1949 = vpop.f32.mrb[0].mxu0
          %1950 = vmatprep.mubr.f32.mxu0 0.0
          %1951 = vmatmul.mubr.f32.gmra.mrb[0].mxu0 %v1715
          %v1952 = vpop.f32.mrb[0].mxu0
          %v1953 = vadd.f32 %v1739, %v1952
          %v1954 = vpop.f32.mrb[0].mxu0
          %1955 = vmatprep.mubr.f32.mxu0 0.0
          %1956 = vmatmul.mubr.f32.gmra.mrb[0].mxu0 %v1716
          %v1957 = vpop.f32.mrb[0].mxu0
          %v1958 = vadd.f32 %v1739, %v1957
          %v1959 = vpop.f32.mrb[0].mxu0
          %1960 = vmatprep.mubr.f32.mxu0 0.0
          %1961 = vmatmul.mubr.f32.gmra.mrb[0].mxu0 %v1717
          %v1962 = vpop.f32.mrb[0].mxu0
          %v1963 = vadd.f32 %v1739, %v1962
          %v1964 = vpop.f32.mrb[0].mxu0
          %1965 = vdwg.mxu0
          %v1966 = vmax.f32 %v1808, 0.0
          %v1967 = vmax.f32 %v1813, 0.0
          %v1968 = vmax.f32 %v1818, 0.0
          %v1969 = vmax.f32 %v1823, 0.0
          %v1970 = vmax.f32 %v1828, 0.0
          %v1971 = vmax.f32 %v1833, 0.0
          %v1972 = vmax.f32 %v1838, 0.0
          %v1973 = vmax.f32 %v1843, 0.0
          %v1974 = vmax.f32 %v1848, 0.0
          %v1975 = vmax.f32 %v1853, 0.0
          %v1976 = vmax.f32 %v1858, 0.0
          %v1977 = vmax.f32 %v1863, 0.0
          %v1978 = vmax.f32 %v1868, 0.0
          %v1979 = vmax.f32 %v1873, 0.0
          %v1980 = vmax.f32 %v1878, 0.0
          %v1981 = vmax.f32 %v1883, 0.0
          %v1982 = vmax.f32 %v1888, 0.0
          %v1983 = vmax.f32 %v1893, 0.0
          %v1984 = vmax.f32 %v1898, 0.0
          %v1985 = vmax.f32 %v1903, 0.0
          %v1986 = vmax.f32 %v1908, 0.0
          %v1987 = vmax.f32 %v1913, 0.0
          %v1988 = vmax.f32 %v1918, 0.0
          %v1989 = vmax.f32 %v1923, 0.0
          %v1990 = vmax.f32 %v1928, 0.0
          %v1991 = vmax.f32 %v1933, 0.0
          %v1992 = vmax.f32 %v1938, 0.0
          %v1993 = vmax.f32 %v1943, 0.0
          %v1994 = vmax.f32 %v1948, 0.0
          %v1995 = vmax.f32 %v1953, 0.0
          %v1996 = vmax.f32 %v1958, 0.0
          %v1997 = vmax.f32 %v1963, 0.0
          %v1998 = vld [vmem:[#allocation15] sm:$0xff]
          %v1999 = vld [vmem:[#allocation15 + $0x8] sm:$0xff]
          %v2000 = vld [vmem:[#allocation15 + $0x10] sm:$0xff]
          %v2001 = vld [vmem:[#allocation15 + $0x18] sm:$0xff]
          %v2002 = vld [vmem:[#allocation15 + $0x20] sm:$0xff]
          %v2003 = vld [vmem:[#allocation15 + $0x28] sm:$0xff]
          %v2004 = vld [vmem:[#allocation15 + $0x30] sm:$0xff]
          %v2005 = vld [vmem:[#allocation15 + $0x38] sm:$0xff]
          %v2006 = vld [vmem:[#allocation15 + $0x40] sm:$0xff]
          %v2007 = vld [vmem:[#allocation15 + $0x48] sm:$0xff]
          %v2008 = vld [vmem:[#allocation15 + $0x50] sm:$0xff]
          %v2009 = vld [vmem:[#allocation15 + $0x58] sm:$0xff]
          %v2010 = vld [vmem:[#allocation15 + $0x60] sm:$0xff]
          %v2011 = vld [vmem:[#allocation15 + $0x68] sm:$0xff]
          %v2012 = vld [vmem:[#allocation15 + $0x70] sm:$0xff]
          %v2013 = vld [vmem:[#allocation15 + $0x78] sm:$0xff]
          %v2014 = vld [vmem:[#allocation17] sm:$0x1]
          %v2016 = vlaneseq
          %v2017 = vshrl.u32 %v2016, 7
          %v2018 = vsub.s32 0, %v2017
          %v2019 = vrot.slane %v2014, %v2018
          %2021 = vmatprep.subr.mxu0 0.0
          %2022 = vmatpush1.msra.mxu0 %v1998
          %2023 = vmatprep.subr.mxu0 0.0
          %2024 = vmatpush1.msra.mxu0 %v1999
          %2025 = vmatprep.subr.mxu0 0.0
          %2026 = vmatpush1.msra.mxu0 %v2000
          %2027 = vmatprep.subr.mxu0 0.0
          %2028 = vmatpush1.msra.mxu0 %v2001
          %2029 = vmatprep.subr.mxu0 0.0
          %2030 = vmatpush1.msra.mxu0 %v2002
          %2031 = vmatprep.subr.mxu0 0.0
          %2032 = vmatpush1.msra.mxu0 %v2003
          %2033 = vmatprep.subr.mxu0 0.0
          %2034 = vmatpush1.msra.mxu0 %v2004
          %2035 = vmatprep.subr.mxu0 0.0
          %2036 = vmatpush1.msra.mxu0 %v2005
          %2037 = vmatprep.subr.mxu0 0.0
          %2038 = vmatpush1.msra.mxu0 %v2006
          %2039 = vmatprep.subr.mxu0 0.0
          %2040 = vmatpush1.msra.mxu0 %v2007
          %2041 = vmatprep.subr.mxu0 0.0
          %2042 = vmatpush1.msra.mxu0 %v2008
          %2043 = vmatprep.subr.mxu0 0.0
          %2044 = vmatpush1.msra.mxu0 %v2009
          %2045 = vmatprep.subr.mxu0 0.0
          %2046 = vmatpush1.msra.mxu0 %v2010
          %2047 = vmatprep.subr.mxu0 0.0
          %2048 = vmatpush1.msra.mxu0 %v2011
          %2049 = vmatprep.subr.mxu0 0.0
          %2050 = vmatpush1.msra.mxu0 %v2012
          %2051 = vmatprep.subr.mxu0 0.0
          %2052 = vmatpush1.msra.mxu0 %v2013
          %2053 = vmatprep.subr.mxu0 0.0
          %2054 = vmatpush1.msra.mxu0 0.0
          %2055 = vmatprep.subr.mxu0 0.0
          %2056 = vmatpush1.msra.mxu0 0.0
          %2057 = vmatprep.subr.mxu0 0.0
          %2058 = vmatpush1.msra.mxu0 0.0
          %2059 = vmatprep.subr.mxu0 0.0
          %2060 = vmatpush1.msra.mxu0 0.0
          %2061 = vmatprep.subr.mxu0 0.0
          %2062 = vmatpush1.msra.mxu0 0.0
          %2063 = vmatprep.subr.mxu0 0.0
          %2064 = vmatpush1.msra.mxu0 0.0
          %2065 = vmatprep.subr.mxu0 0.0
          %2066 = vmatpush1.msra.mxu0 0.0
          %2067 = vmatprep.subr.mxu0 0.0
          %2068 = vmatpush1.msra.mxu0 0.0
          %2069 = vmatprep.subr.mxu0 0.0
          %2070 = vmatpush1.msra.mxu0 0.0
          %2071 = vmatprep.subr.mxu0 0.0
          %2072 = vmatpush1.msra.mxu0 0.0
          %2073 = vmatprep.subr.mxu0 0.0
          %2074 = vmatpush1.msra.mxu0 0.0
          %2075 = vmatprep.subr.mxu0 0.0
          %2076 = vmatpush1.msra.mxu0 0.0
          %2077 = vmatprep.subr.mxu0 0.0
          %2078 = vmatpush1.msra.mxu0 0.0
          %2079 = vmatprep.subr.mxu0 0.0
          %2080 = vmatpush1.msra.mxu0 0.0
          %2081 = vmatprep.subr.mxu0 0.0
          %2082 = vmatpush1.msra.mxu0 0.0
          %2083 = vmatprep.subr.mxu0 0.0
          %2084 = vmatpush1.msra.mxu0 0.0
          %2085 = vmatprep.mubr.f32.mxu0 0.0
          %2086 = vmatmul.mubr.f32.gmra.mrb[0].mxu0 %v1966
          %v2087 = vpop.f32.mrb[0].mxu0
          %v2088 = vadd.f32 %v2019, %v2087
          %v2089 = vpop.f32.mrb[0].mxu0
          %2090 = vmatprep.mubr.f32.mxu0 0.0
          %2091 = vmatmul.mubr.f32.gmra.mrb[0].mxu0 %v1967
          %v2092 = vpop.f32.mrb[0].mxu0
          %v2093 = vadd.f32 %v2019, %v2092
          %v2094 = vpop.f32.mrb[0].mxu0
          %2095 = vmatprep.mubr.f32.mxu0 0.0
          %2096 = vmatmul.mubr.f32.gmra.mrb[0].mxu0 %v1968
          %v2097 = vpop.f32.mrb[0].mxu0
          %v2098 = vadd.f32 %v2019, %v2097
          %v2099 = vpop.f32.mrb[0].mxu0
          %2100 = vmatprep.mubr.f32.mxu0 0.0
          %2101 = vmatmul.mubr.f32.gmra.mrb[0].mxu0 %v1969
          %v2102 = vpop.f32.mrb[0].mxu0
          %v2103 = vadd.f32 %v2019, %v2102
          %v2104 = vpop.f32.mrb[0].mxu0
          %2105 = vmatprep.mubr.f32.mxu0 0.0
          %2106 = vmatmul.mubr.f32.gmra.mrb[0].mxu0 %v1970
          %v2107 = vpop.f32.mrb[0].mxu0
          %v2108 = vadd.f32 %v2019, %v2107
          %v2109 = vpop.f32.mrb[0].mxu0
          %2110 = vmatprep.mubr.f32.mxu0 0.0
          %2111 = vmatmul.mubr.f32.gmra.mrb[0].mxu0 %v1971
          %v2112 = vpop.f32.mrb[0].mxu0
          %v2113 = vadd.f32 %v2019, %v2112
          %v2114 = vpop.f32.mrb[0].mxu0
          %2115 = vmatprep.mubr.f32.mxu0 0.0
          %2116 = vmatmul.mubr.f32.gmra.mrb[0].mxu0 %v1972
          %v2117 = vpop.f32.mrb[0].mxu0
          %v2118 = vadd.f32 %v2019, %v2117
          %v2119 = vpop.f32.mrb[0].mxu0
          %2120 = vmatprep.mubr.f32.mxu0 0.0
          %2121 = vmatmul.mubr.f32.gmra.mrb[0].mxu0 %v1973
          %v2122 = vpop.f32.mrb[0].mxu0
          %v2123 = vadd.f32 %v2019, %v2122
          %v2124 = vpop.f32.mrb[0].mxu0
          %2125 = vmatprep.mubr.f32.mxu0 0.0
          %2126 = vmatmul.mubr.f32.gmra.mrb[0].mxu0 %v1974
          %v2127 = vpop.f32.mrb[0].mxu0
          %v2128 = vadd.f32 %v2019, %v2127
          %v2129 = vpop.f32.mrb[0].mxu0
          %2130 = vmatprep.mubr.f32.mxu0 0.0
          %2131 = vmatmul.mubr.f32.gmra.mrb[0].mxu0 %v1975
          %v2132 = vpop.f32.mrb[0].mxu0
          %v2133 = vadd.f32 %v2019, %v2132
          %v2134 = vpop.f32.mrb[0].mxu0
          %2135 = vmatprep.mubr.f32.mxu0 0.0
          %2136 = vmatmul.mubr.f32.gmra.mrb[0].mxu0 %v1976
          %v2137 = vpop.f32.mrb[0].mxu0
          %v2138 = vadd.f32 %v2019, %v2137
          %v2139 = vpop.f32.mrb[0].mxu0
          %2140 = vmatprep.mubr.f32.mxu0 0.0
          %2141 = vmatmul.mubr.f32.gmra.mrb[0].mxu0 %v1977
          %v2142 = vpop.f32.mrb[0].mxu0
          %v2143 = vadd.f32 %v2019, %v2142
          %v2144 = vpop.f32.mrb[0].mxu0
          %2145 = vmatprep.mubr.f32.mxu0 0.0
          %2146 = vmatmul.mubr.f32.gmra.mrb[0].mxu0 %v1978
          %v2147 = vpop.f32.mrb[0].mxu0
          %v2148 = vadd.f32 %v2019, %v2147
          %v2149 = vpop.f32.mrb[0].mxu0
          %2150 = vmatprep.mubr.f32.mxu0 0.0
          %2151 = vmatmul.mubr.f32.gmra.mrb[0].mxu0 %v1979
          %v2152 = vpop.f32.mrb[0].mxu0
          %v2153 = vadd.f32 %v2019, %v2152
          %v2154 = vpop.f32.mrb[0].mxu0
          %2155 = vmatprep.mubr.f32.mxu0 0.0
          %2156 = vmatmul.mubr.f32.gmra.mrb[0].mxu0 %v1980
          %v2157 = vpop.f32.mrb[0].mxu0
          %v2158 = vadd.f32 %v2019, %v2157
          %v2159 = vpop.f32.mrb[0].mxu0
          %2160 = vmatprep.mubr.f32.mxu0 0.0
          %2161 = vmatmul.mubr.f32.gmra.mrb[0].mxu0 %v1981
          %v2162 = vpop.f32.mrb[0].mxu0
          %v2163 = vadd.f32 %v2019, %v2162
          %v2164 = vpop.f32.mrb[0].mxu0
          %2165 = vmatprep.mubr.f32.mxu0 0.0
          %2166 = vmatmul.mubr.f32.gmra.mrb[0].mxu0 %v1982
          %v2167 = vpop.f32.mrb[0].mxu0
          %v2168 = vadd.f32 %v2019, %v2167
          %v2169 = vpop.f32.mrb[0].mxu0
          %2170 = vmatprep.mubr.f32.mxu0 0.0
          %2171 = vmatmul.mubr.f32.gmra.mrb[0].mxu0 %v1983
          %v2172 = vpop.f32.mrb[0].mxu0
          %v2173 = vadd.f32 %v2019, %v2172
          %v2174 = vpop.f32.mrb[0].mxu0
          %2175 = vmatprep.mubr.f32.mxu0 0.0
          %2176 = vmatmul.mubr.f32.gmra.mrb[0].mxu0 %v1984
          %v2177 = vpop.f32.mrb[0].mxu0
          %v2178 = vadd.f32 %v2019, %v2177
          %v2179 = vpop.f32.mrb[0].mxu0
          %2180 = vmatprep.mubr.f32.mxu0 0.0
          %2181 = vmatmul.mubr.f32.gmra.mrb[0].mxu0 %v1985
          %v2182 = vpop.f32.mrb[0].mxu0
          %v2183 = vadd.f32 %v2019, %v2182
          %v2184 = vpop.f32.mrb[0].mxu0
          %2185 = vmatprep.mubr.f32.mxu0 0.0
          %2186 = vmatmul.mubr.f32.gmra.mrb[0].mxu0 %v1986
          %v2187 = vpop.f32.mrb[0].mxu0
          %v2188 = vadd.f32 %v2019, %v2187
          %v2189 = vpop.f32.mrb[0].mxu0
          %2190 = vmatprep.mubr.f32.mxu0 0.0
          %2191 = vmatmul.mubr.f32.gmra.mrb[0].mxu0 %v1987
          %v2192 = vpop.f32.mrb[0].mxu0
          %v2193 = vadd.f32 %v2019, %v2192
          %v2194 = vpop.f32.mrb[0].mxu0
          %2195 = vmatprep.mubr.f32.mxu0 0.0
          %2196 = vmatmul.mubr.f32.gmra.mrb[0].mxu0 %v1988
          %v2197 = vpop.f32.mrb[0].mxu0
          %v2198 = vadd.f32 %v2019, %v2197
          %v2199 = vpop.f32.mrb[0].mxu0
          %2200 = vmatprep.mubr.f32.mxu0 0.0
          %2201 = vmatmul.mubr.f32.gmra.mrb[0].mxu0 %v1989
          %v2202 = vpop.f32.mrb[0].mxu0
          %v2203 = vadd.f32 %v2019, %v2202
          %v2204 = vpop.f32.mrb[0].mxu0
          %2205 = vmatprep.mubr.f32.mxu0 0.0
          %2206 = vmatmul.mubr.f32.gmra.mrb[0].mxu0 %v1990
          %v2207 = vpop.f32.mrb[0].mxu0
          %v2208 = vadd.f32 %v2019, %v2207
          %v2209 = vpop.f32.mrb[0].mxu0
          %2210 = vmatprep.mubr.f32.mxu0 0.0
          %2211 = vmatmul.mubr.f32.gmra.mrb[0].mxu0 %v1991
          %v2212 = vpop.f32.mrb[0].mxu0
          %v2213 = vadd.f32 %v2019, %v2212
          %v2214 = vpop.f32.mrb[0].mxu0
          %2215 = vmatprep.mubr.f32.mxu0 0.0
          %2216 = vmatmul.mubr.f32.gmra.mrb[0].mxu0 %v1992
          %v2217 = vpop.f32.mrb[0].mxu0
          %v2218 = vadd.f32 %v2019, %v2217
          %v2219 = vpop.f32.mrb[0].mxu0
          %2220 = vmatprep.mubr.f32.mxu0 0.0
          %2221 = vmatmul.mubr.f32.gmra.mrb[0].mxu0 %v1993
          %v2222 = vpop.f32.mrb[0].mxu0
          %v2223 = vadd.f32 %v2019, %v2222
          %v2224 = vpop.f32.mrb[0].mxu0
          %2225 = vmatprep.mubr.f32.mxu0 0.0
          %2226 = vmatmul.mubr.f32.gmra.mrb[0].mxu0 %v1994
          %v2227 = vpop.f32.mrb[0].mxu0
          %v2228 = vadd.f32 %v2019, %v2227
          %v2229 = vpop.f32.mrb[0].mxu0
          %2230 = vmatprep.mubr.f32.mxu0 0.0
          %2231 = vmatmul.mubr.f32.gmra.mrb[0].mxu0 %v1995
          %v2232 = vpop.f32.mrb[0].mxu0
          %v2233 = vadd.f32 %v2019, %v2232
          %v2234 = vpop.f32.mrb[0].mxu0
          %2235 = vmatprep.mubr.f32.mxu0 0.0
          %2236 = vmatmul.mubr.f32.gmra.mrb[0].mxu0 %v1996
          %v2237 = vpop.f32.mrb[0].mxu0
          %v2238 = vadd.f32 %v2019, %v2237
          %v2239 = vpop.f32.mrb[0].mxu0
          %2240 = vmatprep.mubr.f32.mxu0 0.0
          %2241 = vmatmul.mubr.f32.gmra.mrb[0].mxu0 %v1997
          %v2242 = vpop.f32.mrb[0].mxu0
          %v2243 = vadd.f32 %v2019, %v2242
          %v2244 = vpop.f32.mrb[0].mxu0
          %2245 = vdwg.mxu0
          %2246 = vst [vmem:[%s481] sm:$0xff] %v2088
          %2247 = vst [vmem:[%s481 + $0x8] sm:$0xff] %v2093
          %2248 = vst [vmem:[%s481 + $0x10] sm:$0xff] %v2098
          %2249 = vst [vmem:[%s481 + $0x18] sm:$0xff] %v2103
          %2250 = vst [vmem:[%s481 + $0x20] sm:$0xff] %v2108
          %2251 = vst [vmem:[%s481 + $0x28] sm:$0xff] %v2113
          %2252 = vst [vmem:[%s481 + $0x30] sm:$0xff] %v2118
          %2253 = vst [vmem:[%s481 + $0x38] sm:$0xff] %v2123
          %2254 = vst [vmem:[%s481 + $0x40] sm:$0xff] %v2128
          %2255 = vst [vmem:[%s481 + $0x48] sm:$0xff] %v2133
          %2256 = vst [vmem:[%s481 + $0x50] sm:$0xff] %v2138
          %2257 = vst [vmem:[%s481 + $0x58] sm:$0xff] %v2143
          %2258 = vst [vmem:[%s481 + $0x60] sm:$0xff] %v2148
          %2259 = vst [vmem:[%s481 + $0x68] sm:$0xff] %v2153
          %2260 = vst [vmem:[%s481 + $0x70] sm:$0xff] %v2158
          %2261 = vst [vmem:[%s481 + $0x78] sm:$0xff] %v2163
          %2262 = vst [vmem:[%s481 + $0x80] sm:$0xff] %v2168
          %2263 = vst [vmem:[%s481 + $0x88] sm:$0xff] %v2173
          %2264 = vst [vmem:[%s481 + $0x90] sm:$0xff] %v2178
          %2265 = vst [vmem:[%s481 + $0x98] sm:$0xff] %v2183
          %2266 = vst [vmem:[%s481 + $0xa0] sm:$0xff] %v2188
          %2267 = vst [vmem:[%s481 + $0xa8] sm:$0xff] %v2193
          %2268 = vst [vmem:[%s481 + $0xb0] sm:$0xff] %v2198
          %2269 = vst [vmem:[%s481 + $0xb8] sm:$0xff] %v2203
          %2270 = vst [vmem:[%s481 + $0xc0] sm:$0xff] %v2208
          %2271 = vst [vmem:[%s481 + $0xc8] sm:$0xff] %v2213
          %2272 = vst [vmem:[%s481 + $0xd0] sm:$0xff] %v2218
          %2273 = vst [vmem:[%s481 + $0xd8] sm:$0xff] %v2223
          %2274 = vst [vmem:[%s481 + $0xe0] sm:$0xff] %v2228
          %2275 = vst [vmem:[%s481 + $0xe8] sm:$0xff] %v2233
          %2276 = vst [vmem:[%s481 + $0xf0] sm:$0xff] %v2238
          %2277 = vst [vmem:[%s481 + $0xf8] sm:$0xff] %v2243
        $region88: #{tpu_custom_call.1} parent=47 // pred_fallthru
          _
        %s2278 = sand.u32 %s243, 1
        %s2279 = scalar_lea.sflag [#allocation8], %s2278
        %s2280 = sand.u32 %s243, 1
        %s2281 = smul.addr %s2280, 256
        %s2282 = scalar_lea.vmem [#allocation18], %s2281
        // Predicated region
        $region89: #{tpu_custom_call.1} parent=47 // pred_check
          %p2283 = pneg %p253
        $region90: #{tpu_custom_call.1} parent=47 // pred_check_branch
          %2285 = sbr.rel (%p2283) target = $region92
        $region91: #{tpu_custom_call.1} parent=47 // pred_region
          %s2286 = smul.u32 32, %s41
          %s2288 = ssub.s32 4096, 4096
          %2289 = vsyncadd %s2279, %s2288
          %s2290 = smul.addr %s2286, 128
          %s2291 = scalar_lea.hbm %s9, %s2290
          %s2292 = sshll.u32 %s2282, 4
          %s2293 = int_to_ptr.vmem [resolvable:$true] %s2292
          %2298 = dma.vmem_to_hbm [thread:$0]  %s2293, 4096, %s2291, %s2279, 128, 128, 8
        $region92: #{tpu_custom_call.1} parent=47 // pred_fallthru
          _
      $region48: #{tpu_custom_call.1} parent=5 // pred_fallthru
        _
      %p2299 = scmp.le.s32.totalorder 2, %s32
      // Predicated region
      $region93: #{tpu_custom_call.1} parent=5 // pred_check
        %p2300 = pneg %p2299
      $region94: #{tpu_custom_call.1} parent=5 // pred_check_branch
        %2302 = sbr.rel (%p2300) target = $region96
      $region95: #{tpu_custom_call.1} parent=5 // pred_region
        %s2303 = ssub.s32 %s32, 2
        // Predicated region
        $region97: #{tpu_custom_call.1} parent=95 // pred_check
          %p2304 = pneg %p259
        $region98: #{tpu_custom_call.1} parent=95 // pred_check_branch
          %2306 = sbr.rel (%p2304) target = $region100
        $region99: #{tpu_custom_call.1} parent=95 // pred_region
          %s2307 = sand.u32 %s244, 1
          %s2308 = scalar_lea.sflag [#allocation8], %s2307
          %s2309 = sand.u32 %s244, 1
          %s2310 = smul.addr %s2309, 256
          %s2311 = scalar_lea.vmem [#allocation18], %s2310
          %2312 = dma.done %s2308, 4096
        $region100: #{tpu_custom_call.1} parent=95 // pred_fallthru
          _
      $region96: #{tpu_custom_call.1} parent=5 // pred_fallthru
        _
    $region6: #{tpu_custom_call.1} parent=1 // loop_footer
      %s36 = sadd.s32 1, %s32
    $region7: #{tpu_custom_call.1} parent=1 // loop_footer_branch
      %31 = sbr.rel target = $region3
    $region8: #{tpu_custom_call.1} parent=1 // loop_exit
      _
    %2313 = vsyncpa [#allocation7], 1
    %s2314 = scalar_lea.sflag [#allocation7], 1
    %2315 = vsyncpa %s2314, 1
    %2316 = vsyncpa [#allocation10], 1
    %s2317 = scalar_lea.sflag [#allocation10], 1
    %2318 = vsyncpa %s2317, 1
    %2319 = vsyncpa [#allocation13], 1
    %2320 = vsyncpa [#allocation16], 1
    %2321 = vsyncpa [#allocation8], 1
    %s2322 = scalar_lea.sflag [#allocation8], 1
    %2323 = vsyncpa %s2322, 1

</llo_original>
